<compile_context>
chip_gen: v7x
topology: tpu7x:2x2x1
jax: 0.10.0
libtpu: 0.0.40
codegen_flags: <defaults>
</compile_context>

<pallas_src>
import functools

import jax
import jax.numpy as jnp
from jax import lax
from jax.experimental import pallas as pl
from jax.experimental.pallas import tpu as pltpu


# Branch configs: (stride, dilation, padding); kernel_size=2, in_ch=1, out_ch=4
_BRANCHES = ((2, 1, 0), (4, 2, 1), (8, 4, 2))
_K = 2
_KK = _K * _K
_CO = 4
_NB = len(_BRANCHES)
_SHARED_PAD = 2            # max padding over branches; each branch offsets inside it
_POOL_OUT = 6              # AdaptiveAvgPool2d((6, 6))
_H1, _H1P = 150, 256       # FC1 width, padded to a full MXU column tile
_H2, _H2P = 50, 128        # FC2 width, padded likewise


def _round_up(v, m):
    return ((v + m - 1) // m) * m


def _branch_out_hw(H, W, stride, dilation, padding):
    eff = dilation * (_K - 1) + 1
    return ((H + 2 * padding - eff) // stride + 1,
            (W + 2 * padding - eff) // stride + 1)


def _cropped_hw(H, W):
    hs, ws = zip(*[_branch_out_hw(H, W, s, d, p) for (s, d, p) in _BRANCHES])
    return min(hs), min(ws)


def _pick_batch_tile(n):
    """Batch rows per grid step.

    Fill the MXU M dimension (256 matches v6e/v7x; v5e simply uses 2 M tiles),
    keep >=2 grid steps when the batch allows it (both v7x TensorCores get
    work), and avoid huge padding for tiny batches (multiple of 8 sublanes).
    """
    if n >= 512:
        return 256
    if n >= 16:
        return min(256, _round_up((n + 1) // 2, 8))
    return _round_up(max(n, 1), 8)


# ----------------------------------------------------------------------------
# Fused Pallas kernel: conv (VPU FMAs) + ReLU + pooled-FC1 + FC2 + FC3
# ----------------------------------------------------------------------------
def fused_kernel(taps_ref, wv_ref, bv_ref,
                 w1_ref, b1_ref, w2_ref, b2_ref, w3_ref, b3_ref, o_ref):
    """One batch tile (TB rows) per grid step.

    taps_ref : (KK, TB, Gp) bf16  un-replicated tap planes; G = NB*HW (branch-major)
    wv_ref   : (CO*KK, Gp)  f32   conv weight broadcast along G; row = co*KK + tap
    bv_ref   : (CO, Gp)     f32   conv bias broadcast along G
    w1_ref   : (CO, Gp, H1P) bf16 FC1 weight with avg-pool + flatten folded in,
                                  one (Gp, H1P) slab per conv output channel
    w2_ref   : (H1P, H2P)   bf16 ; w3_ref : (H2P, 2) f32 ; biases f32
    o_ref    : (TB, 2)      f32
    """
    tb = taps_ref.shape[1]
    h1p = b1_ref.shape[-1]

    # Load each tap plane once (leading-dim index, no sublane slicing) and
    # upcast to f32 so the VPU conv math is exact on all chips.
    taps = [taps_ref[t].astype(jnp.float32) for t in range(_KK)]      # KK x (TB, Gp)

    h1 = jnp.zeros((tb, h1p), jnp.float32)
    for co in range(_CO):
        # 2x2 conv for output channel `co`: 4 lane-dense VPU FMAs against
        # per-branch broadcast weights (MXU would be >96% idle on K=4 / N=4).
        conv = bv_ref[co:co + 1, :]                                   # (1, Gp)
        for t in range(_KK):
            conv = conv + taps[t] * wv_ref[co * _KK + t:co * _KK + t + 1, :]
        conv = jnp.maximum(conv, 0.0).astype(jnp.bfloat16)            # (TB, Gp)
        # Pool + flatten are folded into w1; accumulate FC1 over channels so the
        # (TB, CO*Gp) conv activation never has to be materialized / reshaped.
        h1 = h1 + jnp.dot(conv, w1_ref[co],
                          preferred_element_type=jnp.float32)         # (TB, H1P)

    h1 = jnp.maximum(h1 + b1_ref[...], 0.0).astype(jnp.bfloat16)
    h2 = jnp.maximum(
        jnp.dot(h1, w2_ref[...], preferred_element_type=jnp.float32) + b2_ref[...],
        0.0)                                                          # (TB, H2P) f32
    o_ref[...] = (jnp.dot(h2, w3_ref[...],
                          preferred_element_type=jnp.float32) + b3_ref[...])


# ----------------------------------------------------------------------------
# Forward wrapper (only cheap tap slicing happens outside the kernel)
# ----------------------------------------------------------------------------
def incept_dilationconv_forward(x, fparams):
    """x: NCHW (N, 1, H, W) float32.  fparams: prepare_params output.  Returns (N, 2)."""
    N, C, H, W = x.shape
    assert C == 1
    Hm, Wm = _cropped_hw(H, W)
    HW = Hm * Wm
    G = _NB * HW
    Gp = _round_up(G, 128)
    assert fparams["w1p"].shape == (_CO, Gp, _H1P), \
        "params were prepared for a different input size"

    TB = _pick_batch_tile(N)
    n_steps = pl.cdiv(N, TB)
    Npad = n_steps * TB

    xs = x[:, 0].astype(jnp.float32)
    xpad = jnp.pad(xs, ((0, 0), (_SHARED_PAD, _SHARED_PAD), (_SHARED_PAD, _SHARED_PAD)))

    # im2col tap planes for the (top-left-cropped Hm x Wm) outputs of every
    # branch, branch-major along the lane axis. NOT replicated per out-channel.
    tap_planes = []
    for ki in range(_K):
        for kj in range(_K):
            per_b = []
            for (s, d, p) in _BRANCHES:
                off = _SHARED_PAD - p
                r0, c0 = off + d * ki, off + d * kj
                sl = xpad[:, r0:r0 + s * (Hm - 1) + 1:s, c0:c0 + s * (Wm - 1) + 1:s]
                per_b.append(sl.reshape(N, HW))
            tap_planes.append(jnp.concatenate(per_b, axis=1))          # (N, G)
    taps = jnp.stack(tap_planes, axis=0)                               # (KK, N, G)
    taps = jnp.pad(taps, ((0, 0), (0, Npad - N), (0, Gp - G))).astype(jnp.bfloat16)

    out = pl.pallas_call(
        fused_kernel,
        out_shape=jax.ShapeDtypeStruct((Npad, 2), jnp.float32),
        grid=(n_steps,),
        in_specs=[
            pl.BlockSpec((_KK, TB, Gp), lambda n: (0, n, 0)),          # taps (streamed)
            pl.BlockSpec((_CO * _KK, Gp), lambda n: (0, 0)),           # conv weights
            pl.BlockSpec((_CO, Gp), lambda n: (0, 0)),                 # conv bias
            pl.BlockSpec((_CO, Gp, _H1P), lambda n: (0, 0, 0)),        # pooled FC1 (bf16)
            pl.BlockSpec((1, _H1P), lambda n: (0, 0)),                 # b_fc1
            pl.BlockSpec((_H1P, _H2P), lambda n: (0, 0)),              # w_fc2 (bf16)
            pl.BlockSpec((1, _H2P), lambda n: (0, 0)),                 # b_fc2
            pl.BlockSpec((_H2P, 2), lambda n: (0, 0)),                 # w_fc3
            pl.BlockSpec((1, 2), lambda n: (0, 0)),                    # b_fc3
        ],
        out_specs=pl.BlockSpec((TB, 2), lambda n: (n, 0)),
        compiler_params=pltpu.CompilerParams(
            dimension_semantics=("parallel",)),   # independent batch tiles
    )(taps, fparams["wvec"], fparams["bvec"],
      fparams["w1p"], fparams["b_fc1"],
      fparams["w_fc2"], fparams["b_fc2"],
      fparams["w_fc3"], fparams["b_fc3"])
    return out[:N]


# ----------------------------------------------------------------------------
# Parameters: raw (PyTorch-shaped) init + one-time layout/pool/pad folding
# ----------------------------------------------------------------------------
def init_params(key):
    ks = jax.random.split(key, 12)
    s = 0.1
    return {
        "w2x2": jax.random.normal(ks[0], (4, 1, 2, 2), jnp.float32) * s,
        "b2x2": jax.random.normal(ks[1], (4,), jnp.float32) * s,
        "w3x3": jax.random.normal(ks[2], (4, 1, 2, 2), jnp.float32) * s,
        "b3x3": jax.random.normal(ks[3], (4,), jnp.float32) * s,
        "w5x5": jax.random.normal(ks[4], (4, 1, 2, 2), jnp.float32) * s,
        "b5x5": jax.random.normal(ks[5], (4,), jnp.float32) * s,
        # Linear weights stored transposed (in, out): y = x @ W + b
        "w_fc1": jax.random.normal(ks[6], (12 * 6 * 6, 150), jnp.float32) * s,
        "b_fc1": jax.random.normal(ks[7], (1, 150), jnp.float32) * s,
        "w_fc2": jax.random.normal(ks[8], (150, 50), jnp.float32) * s,
        "b_fc2": jax.random.normal(ks[9], (1, 50), jnp.float32) * s,
        "w_fc3": jax.random.normal(ks[10], (50, 2), jnp.float32) * s,
        "b_fc3": jax.random.normal(ks[11], (1, 2), jnp.float32) * s,
    }


def prepare_params(params, H, W):
    """One-time fold of conv layout, avg-pool, flatten order and MXU padding."""
    Hm, Wm = _cropped_hw(H, W)
    assert Hm % _POOL_OUT == 0 and Wm % _POOL_OUT == 0, \
        "choose an input size whose cropped spatial dims are divisible by 6"
    kh, kw = Hm // _POOL_OUT, Wm // _POOL_OUT
    HW = Hm * Wm
    G = _NB * HW
    Gp = _round_up(G, 128)

    # Conv weights/biases broadcast along the branch-major G axis (lane-dense).
    wcat = jnp.stack([params["w2x2"], params["w3x3"], params["w5x5"]],
                     axis=0).reshape(_NB, _CO, _KK)                    # [b, co, t]
    bcat = jnp.stack([params["b2x2"], params["b3x3"], params["b5x5"]], axis=0)  # [b, co]

    wvec = jnp.transpose(wcat, (1, 2, 0))                              # [co, t, b]
    wvec = jnp.broadcast_to(wvec[..., None], (_CO, _KK, _NB, HW)).reshape(_CO * _KK, G)
    wvec = jnp.pad(wvec, ((0, 0), (0, Gp - G)))
    bvec = jnp.broadcast_to(bcat.T[:, :, None], (_CO, _NB, HW)).reshape(_CO, G)
    bvec = jnp.pad(bvec, ((0, 0), (0, Gp - G)))

    # Fold AdaptiveAvgPool2d((6,6)) + torch.flatten(x,1) into FC1: conv column
    # (co, b*HW + i*Wm + j) feeds pooled feature (b*CO+co)*36 + (i//kh)*6 + (j//kw),
    # scaled by 1/(kh*kw).  Zero-pad K (G->Gp) and FC1 out (150->256) for full
    # MXU tiles.  (Pool is linear and applied after ReLU -> exact.)
    ii, jj = jnp.meshgrid(jnp.arange(Hm), jnp.arange(Wm), indexing="ij")
    sidx = ((ii // kh) * _POOL_OUT + (jj // kw)).reshape(-1)           # (HW,)
    w1p = jnp.zeros((_CO, Gp, _H1P), jnp.float32)
    for co in range(_CO):
        chan = jnp.arange(_NB) * _CO + co                              # concat channel id
        rows = (chan[:, None] * (_POOL_OUT * _POOL_OUT) + sidx[None]).reshape(G)
        slab = params["w_fc1"][rows, :] / float(kh * kw)               # (G, 150)
        slab = jnp.pad(slab, ((0, Gp - G), (0, _H1P - _H1)))
        w1p = w1p.at[co].set(slab)

    b1 = jnp.pad(params["b_fc1"], ((0, 0), (0, _H1P - _H1)))
    w2 = jnp.pad(params["w_fc2"], ((0, _H1P - _H1), (0, _H2P - _H2)))
    b2 = jnp.pad(params["b_fc2"], ((0, 0), (0, _H2P - _H2)))
    w3 = jnp.pad(params["w_fc3"], ((0, _H2P - _H2), (0, 0)))

    return {
        "wvec": wvec.astype(jnp.float32),
        "bvec": bvec.astype(jnp.float32),
        "w1p": w1p.astype(jnp.bfloat16),
        "b_fc1": b1.astype(jnp.float32),
        "w_fc2": w2.astype(jnp.bfloat16),
        "b_fc2": b2.astype(jnp.float32),
        "w_fc3": w3.astype(jnp.float32),
        "b_fc3": params["b_fc3"].astype(jnp.float32),
    }


# ----------------------------------------------------------------------------
# Pure-JAX reference (same crop/concat assumption) for a correctness check
# ----------------------------------------------------------------------------
def _reference_forward(x, params):
    N, _, H, W = x.shape
    Hm, Wm = _cropped_hw(H, W)
    kh, kw = Hm // _POOL_OUT, Wm // _POOL_OUT
    feats = []
    for (wk, bk), (s, d, p) in zip(
            (("w2x2", "b2x2"), ("w3x3", "b3x3"), ("w5x5", "b5x5")), _BRANCHES):
        y = lax.conv_general_dilated(
            x, params[wk], window_strides=(s, s), padding=((p, p), (p, p)),
            rhs_dilation=(d, d), dimension_numbers=("NCHW", "OIHW", "NCHW"))
        y = jnp.maximum(y + params[bk][None, :, None, None], 0.0)
        feats.append(y[:, :, :Hm, :Wm])      # top-left crop (tensor_cat assumption)
    f = jnp.concatenate(feats, axis=1)       # (N, 12, Hm, Wm)
    f = f.reshape(N, 12, _POOL_OUT, kh, _POOL_OUT, kw).mean(axis=(3, 5))
    f = f.reshape(N, -1)                      # channel-major flatten
    h1 = jnp.maximum(f @ params["w_fc1"] + params["b_fc1"], 0.0)
    h2 = jnp.maximum(h1 @ params["w_fc2"] + params["b_fc2"], 0.0)
    return h2 @ params["w_fc3"] + params["b_fc3"]


if __name__ == "__main__":
    key = jax.random.PRNGKey(0)
    kx, kp = jax.random.split(key)
    # N=20, C=1, H=W=48 → branch outputs 24/12/6, crop→6, pool 6x6 (identity),
    # flatten→12*6*6=432, classifier→2.  Exercises a 2-step batched grid plus
    # batch-tail padding (TB=16, Npad=32).
    N, H, W = 20, 48, 48
    x = jax.random.normal(kx, (N, 1, H, W), jnp.float32)
    params = init_params(kp)
    fparams = prepare_params(params, H, W)      # one-time weight folding (not per call)

    fwd = jax.jit(functools.partial(incept_dilationconv_forward, fparams=fparams))
    out = fwd(x)
    jax.block_until_ready(out)
    assert out.shape == (N, 2) and out.dtype == jnp.float32

    ref = _reference_forward(x, params)
    err = float(jnp.max(jnp.abs(out - ref)))
    assert err < 5e-2, f"mismatch vs reference: max|diff|={err}"
    print("KERNEL_OK")
</pallas_src>

<mosaic_0001>
module attributes {stable_mosaic.version = 11 : i64} {
  func.func @fused_kernel(%arg0: i32, %arg1: memref<4x16x128xbf16, #tpu.memory_space<vmem>>, %arg2: memref<16x128xf32, #tpu.memory_space<vmem>>, %arg3: memref<4x128xf32, #tpu.memory_space<vmem>>, %arg4: memref<4x128x256xbf16, #tpu.memory_space<vmem>>, %arg5: memref<1x256xf32, #tpu.memory_space<vmem>>, %arg6: memref<256x128xbf16, #tpu.memory_space<vmem>>, %arg7: memref<1x128xf32, #tpu.memory_space<vmem>>, %arg8: memref<128x2xf32, #tpu.memory_space<vmem>>, %arg9: memref<1x2xf32, #tpu.memory_space<vmem>>, %arg10: memref<16x2xf32, #tpu.memory_space<vmem>>) attributes {dimension_semantics = [#tpu.dimension_semantics<parallel>], iteration_bounds = array<i64: 2>, scalar_prefetch = 0 : i64, scratch_operands = 0 : i64, tpu.core_type = #tpu.core_type<tc>, window_params = [{transform_indices = @transform_0, window_bounds = array<i64: 4, 16, 128>}, {pipeline_mode = #tpu.pipeline_mode<synchronous>, transform_indices = @transform_1, window_bounds = array<i64: 16, 128>}, {pipeline_mode = #tpu.pipeline_mode<synchronous>, transform_indices = @transform_2, window_bounds = array<i64: 4, 128>}, {pipeline_mode = #tpu.pipeline_mode<synchronous>, transform_indices = @transform_3, window_bounds = array<i64: 4, 128, 256>}, {pipeline_mode = #tpu.pipeline_mode<synchronous>, transform_indices = @transform_4, window_bounds = array<i64: 1, 256>}, {pipeline_mode = #tpu.pipeline_mode<synchronous>, transform_indices = @transform_5, window_bounds = array<i64: 256, 128>}, {pipeline_mode = #tpu.pipeline_mode<synchronous>, transform_indices = @transform_6, window_bounds = array<i64: 1, 128>}, {pipeline_mode = #tpu.pipeline_mode<synchronous>, transform_indices = @transform_7, window_bounds = array<i64: 128, 2>}, {pipeline_mode = #tpu.pipeline_mode<synchronous>, transform_indices = @transform_8, window_bounds = array<i64: 1, 2>}, {transform_indices = @transform_9, window_bounds = array<i64: 16, 2>}]} {
    %c0 = arith.constant 0 : index
    %c0_0 = arith.constant 0 : index
    %c0_1 = arith.constant 0 : index
    %0 = vector.load %arg1[%c0, %c0_0, %c0_1] : memref<4x16x128xbf16, #tpu.memory_space<vmem>>, vector<1x16x128xbf16>
    %1 = vector.shape_cast %0 : vector<1x16x128xbf16> to vector<16x128xbf16>
    %2 = arith.extf %1 : vector<16x128xbf16> to vector<16x128xf32>
    %c1 = arith.constant 1 : index
    %c0_2 = arith.constant 0 : index
    %c0_3 = arith.constant 0 : index
    %3 = vector.load %arg1[%c1, %c0_2, %c0_3] : memref<4x16x128xbf16, #tpu.memory_space<vmem>>, vector<1x16x128xbf16>
    %4 = vector.shape_cast %3 : vector<1x16x128xbf16> to vector<16x128xbf16>
    %5 = arith.extf %4 : vector<16x128xbf16> to vector<16x128xf32>
    %c2 = arith.constant 2 : index
    %c0_4 = arith.constant 0 : index
    %c0_5 = arith.constant 0 : index
    %6 = vector.load %arg1[%c2, %c0_4, %c0_5] : memref<4x16x128xbf16, #tpu.memory_space<vmem>>, vector<1x16x128xbf16>
    %7 = vector.shape_cast %6 : vector<1x16x128xbf16> to vector<16x128xbf16>
    %8 = arith.extf %7 : vector<16x128xbf16> to vector<16x128xf32>
    %c3 = arith.constant 3 : index
    %c0_6 = arith.constant 0 : index
    %c0_7 = arith.constant 0 : index
    %9 = vector.load %arg1[%c3, %c0_6, %c0_7] : memref<4x16x128xbf16, #tpu.memory_space<vmem>>, vector<1x16x128xbf16>
    %10 = vector.shape_cast %9 : vector<1x16x128xbf16> to vector<16x128xbf16>
    %11 = arith.extf %10 : vector<16x128xbf16> to vector<16x128xf32>
    %cst = arith.constant 0.000000e+00 : f32
    %12 = vector.broadcast %cst : f32 to vector<16x256xf32>
    %c0_8 = arith.constant 0 : index
    %c0_9 = arith.constant 0 : index
    %13 = vector.load %arg3[%c0_8, %c0_9] : memref<4x128xf32, #tpu.memory_space<vmem>>, vector<1x128xf32>
    %c0_10 = arith.constant 0 : index
    %c0_11 = arith.constant 0 : index
    %14 = vector.load %arg2[%c0_10, %c0_11] : memref<16x128xf32, #tpu.memory_space<vmem>>, vector<1x128xf32>
    %15 = vector.broadcast %14 : vector<1x128xf32> to vector<16x128xf32>
    %16 = arith.mulf %2, %15 : vector<16x128xf32>
    %17 = vector.broadcast %13 : vector<1x128xf32> to vector<16x128xf32>
    %18 = arith.addf %17, %16 : vector<16x128xf32>
    %c1_12 = arith.constant 1 : index
    %c0_13 = arith.constant 0 : index
    %19 = vector.load %arg2[%c1_12, %c0_13] : memref<16x128xf32, #tpu.memory_space<vmem>>, vector<1x128xf32>
    %20 = vector.broadcast %19 : vector<1x128xf32> to vector<16x128xf32>
    %21 = arith.mulf %5, %20 : vector<16x128xf32>
    %22 = arith.addf %18, %21 : vector<16x128xf32>
    %c2_14 = arith.constant 2 : index
    %c0_15 = arith.constant 0 : index
    %23 = vector.load %arg2[%c2_14, %c0_15] : memref<16x128xf32, #tpu.memory_space<vmem>>, vector<1x128xf32>
    %24 = vector.broadcast %23 : vector<1x128xf32> to vector<16x128xf32>
    %25 = arith.mulf %8, %24 : vector<16x128xf32>
    %26 = arith.addf %22, %25 : vector<16x128xf32>
    %c3_16 = arith.constant 3 : index
    %c0_17 = arith.constant 0 : index
    %27 = vector.load %arg2[%c3_16, %c0_17] : memref<16x128xf32, #tpu.memory_space<vmem>>, vector<1x128xf32>
    %28 = vector.broadcast %27 : vector<1x128xf32> to vector<16x128xf32>
    %29 = arith.mulf %11, %28 : vector<16x128xf32>
    %30 = arith.addf %26, %29 : vector<16x128xf32>
    %cst_18 = arith.constant 0.000000e+00 : f32
    %31 = vector.broadcast %cst_18 : f32 to vector<16x128xf32>
    %32 = arith.maximumf %30, %31 : vector<16x128xf32>
    %33 = arith.truncf %32 : vector<16x128xf32> to vector<16x128xbf16>
    %c0_19 = arith.constant 0 : index
    %c0_20 = arith.constant 0 : index
    %c0_21 = arith.constant 0 : index
    %34 = vector.load %arg4[%c0_19, %c0_20, %c0_21] : memref<4x128x256xbf16, #tpu.memory_space<vmem>>, vector<1x128x256xbf16>
    %35 = vector.shape_cast %34 : vector<1x128x256xbf16> to vector<128x256xbf16>
    %cst_22 = arith.constant dense<0.000000e+00> : vector<16x256xf32>
    %36 = tpu.matmul %33, %35, %cst_22 {dimension_numbers = #tpu.dot_dimension_numbers<[1], [0], [0], [1], [0, 0, 1, 1], [], []>} : vector<16x128xbf16>, vector<128x256xbf16>, vector<16x256xf32> -> vector<16x256xf32>
    %37 = arith.addf %12, %36 : vector<16x256xf32>
    %c1_23 = arith.constant 1 : index
    %c0_24 = arith.constant 0 : index
    %38 = vector.load %arg3[%c1_23, %c0_24] : memref<4x128xf32, #tpu.memory_space<vmem>>, vector<1x128xf32>
    %c4 = arith.constant 4 : index
    %c0_25 = arith.constant 0 : index
    %39 = vector.load %arg2[%c4, %c0_25] : memref<16x128xf32, #tpu.memory_space<vmem>>, vector<1x128xf32>
    %40 = vector.broadcast %39 : vector<1x128xf32> to vector<16x128xf32>
    %41 = arith.mulf %2, %40 : vector<16x128xf32>
    %42 = vector.broadcast %38 : vector<1x128xf32> to vector<16x128xf32>
    %43 = arith.addf %42, %41 : vector<16x128xf32>
    %c5 = arith.constant 5 : index
    %c0_26 = arith.constant 0 : index
    %44 = vector.load %arg2[%c5, %c0_26] : memref<16x128xf32, #tpu.memory_space<vmem>>, vector<1x128xf32>
    %45 = vector.broadcast %44 : vector<1x128xf32> to vector<16x128xf32>
    %46 = arith.mulf %5, %45 : vector<16x128xf32>
    %47 = arith.addf %43, %46 : vector<16x128xf32>
    %c6 = arith.constant 6 : index
    %c0_27 = arith.constant 0 : index
    %48 = vector.load %arg2[%c6, %c0_27] : memref<16x128xf32, #tpu.memory_space<vmem>>, vector<1x128xf32>
    %49 = vector.broadcast %48 : vector<1x128xf32> to vector<16x128xf32>
    %50 = arith.mulf %8, %49 : vector<16x128xf32>
    %51 = arith.addf %47, %50 : vector<16x128xf32>
    %c7 = arith.constant 7 : index
    %c0_28 = arith.constant 0 : index
    %52 = vector.load %arg2[%c7, %c0_28] : memref<16x128xf32, #tpu.memory_space<vmem>>, vector<1x128xf32>
    %53 = vector.broadcast %52 : vector<1x128xf32> to vector<16x128xf32>
    %54 = arith.mulf %11, %53 : vector<16x128xf32>
    %55 = arith.addf %51, %54 : vector<16x128xf32>
    %cst_29 = arith.constant 0.000000e+00 : f32
    %56 = vector.broadcast %cst_29 : f32 to vector<16x128xf32>
    %57 = arith.maximumf %55, %56 : vector<16x128xf32>
    %58 = arith.truncf %57 : vector<16x128xf32> to vector<16x128xbf16>
    %c1_30 = arith.constant 1 : index
    %c0_31 = arith.constant 0 : index
    %c0_32 = arith.constant 0 : index
    %59 = vector.load %arg4[%c1_30, %c0_31, %c0_32] : memref<4x128x256xbf16, #tpu.memory_space<vmem>>, vector<1x128x256xbf16>
    %60 = vector.shape_cast %59 : vector<1x128x256xbf16> to vector<128x256xbf16>
    %cst_33 = arith.constant dense<0.000000e+00> : vector<16x256xf32>
    %61 = tpu.matmul %58, %60, %cst_33 {dimension_numbers = #tpu.dot_dimension_numbers<[1], [0], [0], [1], [0, 0, 1, 1], [], []>} : vector<16x128xbf16>, vector<128x256xbf16>, vector<16x256xf32> -> vector<16x256xf32>
    %62 = arith.addf %37, %61 : vector<16x256xf32>
    %c2_34 = arith.constant 2 : index
    %c0_35 = arith.constant 0 : index
    %63 = vector.load %arg3[%c2_34, %c0_35] : memref<4x128xf32, #tpu.memory_space<vmem>>, vector<1x128xf32>
    %c8 = arith.constant 8 : index
    %c0_36 = arith.constant 0 : index
    %64 = vector.load %arg2[%c8, %c0_36] : memref<16x128xf32, #tpu.memory_space<vmem>>, vector<1x128xf32>
    %65 = vector.broadcast %64 : vector<1x128xf32> to vector<16x128xf32>
    %66 = arith.mulf %2, %65 : vector<16x128xf32>
    %67 = vector.broadcast %63 : vector<1x128xf32> to vector<16x128xf32>
    %68 = arith.addf %67, %66 : vector<16x128xf32>
    %c9 = arith.constant 9 : index
    %c0_37 = arith.constant 0 : index
    %69 = vector.load %arg2[%c9, %c0_37] : memref<16x128xf32, #tpu.memory_space<vmem>>, vector<1x128xf32>
    %70 = vector.broadcast %69 : vector<1x128xf32> to vector<16x128xf32>
    %71 = arith.mulf %5, %70 : vector<16x128xf32>
    %72 = arith.addf %68, %71 : vector<16x128xf32>
    %c10 = arith.constant 10 : index
    %c0_38 = arith.constant 0 : index
    %73 = vector.load %arg2[%c10, %c0_38] : memref<16x128xf32, #tpu.memory_space<vmem>>, vector<1x128xf32>
    %74 = vector.broadcast %73 : vector<1x128xf32> to vector<16x128xf32>
    %75 = arith.mulf %8, %74 : vector<16x128xf32>
    %76 = arith.addf %72, %75 : vector<16x128xf32>
    %c11 = arith.constant 11 : index
    %c0_39 = arith.constant 0 : index
    %77 = vector.load %arg2[%c11, %c0_39] : memref<16x128xf32, #tpu.memory_space<vmem>>, vector<1x128xf32>
    %78 = vector.broadcast %77 : vector<1x128xf32> to vector<16x128xf32>
    %79 = arith.mulf %11, %78 : vector<16x128xf32>
    %80 = arith.addf %76, %79 : vector<16x128xf32>
    %cst_40 = arith.constant 0.000000e+00 : f32
    %81 = vector.broadcast %cst_40 : f32 to vector<16x128xf32>
    %82 = arith.maximumf %80, %81 : vector<16x128xf32>
    %83 = arith.truncf %82 : vector<16x128xf32> to vector<16x128xbf16>
    %c2_41 = arith.constant 2 : index
    %c0_42 = arith.constant 0 : index
    %c0_43 = arith.constant 0 : index
    %84 = vector.load %arg4[%c2_41, %c0_42, %c0_43] : memref<4x128x256xbf16, #tpu.memory_space<vmem>>, vector<1x128x256xbf16>
    %85 = vector.shape_cast %84 : vector<1x128x256xbf16> to vector<128x256xbf16>
    %cst_44 = arith.constant dense<0.000000e+00> : vector<16x256xf32>
    %86 = tpu.matmul %83, %85, %cst_44 {dimension_numbers = #tpu.dot_dimension_numbers<[1], [0], [0], [1], [0, 0, 1, 1], [], []>} : vector<16x128xbf16>, vector<128x256xbf16>, vector<16x256xf32> -> vector<16x256xf32>
    %87 = arith.addf %62, %86 : vector<16x256xf32>
    %c3_45 = arith.constant 3 : index
    %c0_46 = arith.constant 0 : index
    %88 = vector.load %arg3[%c3_45, %c0_46] : memref<4x128xf32, #tpu.memory_space<vmem>>, vector<1x128xf32>
    %c12 = arith.constant 12 : index
    %c0_47 = arith.constant 0 : index
    %89 = vector.load %arg2[%c12, %c0_47] : memref<16x128xf32, #tpu.memory_space<vmem>>, vector<1x128xf32>
    %90 = vector.broadcast %89 : vector<1x128xf32> to vector<16x128xf32>
    %91 = arith.mulf %2, %90 : vector<16x128xf32>
    %92 = vector.broadcast %88 : vector<1x128xf32> to vector<16x128xf32>
    %93 = arith.addf %92, %91 : vector<16x128xf32>
    %c13 = arith.constant 13 : index
    %c0_48 = arith.constant 0 : index
    %94 = vector.load %arg2[%c13, %c0_48] : memref<16x128xf32, #tpu.memory_space<vmem>>, vector<1x128xf32>
    %95 = vector.broadcast %94 : vector<1x128xf32> to vector<16x128xf32>
    %96 = arith.mulf %5, %95 : vector<16x128xf32>
    %97 = arith.addf %93, %96 : vector<16x128xf32>
    %c14 = arith.constant 14 : index
    %c0_49 = arith.constant 0 : index
    %98 = vector.load %arg2[%c14, %c0_49] : memref<16x128xf32, #tpu.memory_space<vmem>>, vector<1x128xf32>
    %99 = vector.broadcast %98 : vector<1x128xf32> to vector<16x128xf32>
    %100 = arith.mulf %8, %99 : vector<16x128xf32>
    %101 = arith.addf %97, %100 : vector<16x128xf32>
    %c15 = arith.constant 15 : index
    %c0_50 = arith.constant 0 : index
    %102 = vector.load %arg2[%c15, %c0_50] : memref<16x128xf32, #tpu.memory_space<vmem>>, vector<1x128xf32>
    %103 = vector.broadcast %102 : vector<1x128xf32> to vector<16x128xf32>
    %104 = arith.mulf %11, %103 : vector<16x128xf32>
    %105 = arith.addf %101, %104 : vector<16x128xf32>
    %cst_51 = arith.constant 0.000000e+00 : f32
    %106 = vector.broadcast %cst_51 : f32 to vector<16x128xf32>
    %107 = arith.maximumf %105, %106 : vector<16x128xf32>
    %108 = arith.truncf %107 : vector<16x128xf32> to vector<16x128xbf16>
    %c3_52 = arith.constant 3 : index
    %c0_53 = arith.constant 0 : index
    %c0_54 = arith.constant 0 : index
    %109 = vector.load %arg4[%c3_52, %c0_53, %c0_54] : memref<4x128x256xbf16, #tpu.memory_space<vmem>>, vector<1x128x256xbf16>
    %110 = vector.shape_cast %109 : vector<1x128x256xbf16> to vector<128x256xbf16>
    %cst_55 = arith.constant dense<0.000000e+00> : vector<16x256xf32>
    %111 = tpu.matmul %108, %110, %cst_55 {dimension_numbers = #tpu.dot_dimension_numbers<[1], [0], [0], [1], [0, 0, 1, 1], [], []>} : vector<16x128xbf16>, vector<128x256xbf16>, vector<16x256xf32> -> vector<16x256xf32>
    %112 = arith.addf %87, %111 : vector<16x256xf32>
    %c0_56 = arith.constant 0 : index
    %c0_57 = arith.constant 0 : index
    %113 = vector.load %arg5[%c0_56, %c0_57] : memref<1x256xf32, #tpu.memory_space<vmem>>, vector<1x256xf32>
    %114 = vector.broadcast %113 : vector<1x256xf32> to vector<16x256xf32>
    %115 = arith.addf %112, %114 : vector<16x256xf32>
    %cst_58 = arith.constant 0.000000e+00 : f32
    %116 = vector.broadcast %cst_58 : f32 to vector<16x256xf32>
    %117 = arith.maximumf %115, %116 : vector<16x256xf32>
    %118 = arith.truncf %117 : vector<16x256xf32> to vector<16x256xbf16>
    %c0_59 = arith.constant 0 : index
    %c0_60 = arith.constant 0 : index
    %119 = vector.load %arg6[%c0_59, %c0_60] : memref<256x128xbf16, #tpu.memory_space<vmem>>, vector<256x128xbf16>
    %cst_61 = arith.constant dense<0.000000e+00> : vector<16x128xf32>
    %120 = tpu.matmul %118, %119, %cst_61 {dimension_numbers = #tpu.dot_dimension_numbers<[1], [0], [0], [1], [0, 0, 1, 1], [], []>} : vector<16x256xbf16>, vector<256x128xbf16>, vector<16x128xf32> -> vector<16x128xf32>
    %c0_62 = arith.constant 0 : index
    %c0_63 = arith.constant 0 : index
    %121 = vector.load %arg7[%c0_62, %c0_63] : memref<1x128xf32, #tpu.memory_space<vmem>>, vector<1x128xf32>
    %122 = vector.broadcast %121 : vector<1x128xf32> to vector<16x128xf32>
    %123 = arith.addf %120, %122 : vector<16x128xf32>
    %cst_64 = arith.constant 0.000000e+00 : f32
    %124 = vector.broadcast %cst_64 : f32 to vector<16x128xf32>
    %125 = arith.maximumf %123, %124 : vector<16x128xf32>
    %c0_65 = arith.constant 0 : index
    %c0_66 = arith.constant 0 : index
    %126 = vector.load %arg8[%c0_65, %c0_66] : memref<128x2xf32, #tpu.memory_space<vmem>>, vector<128x2xf32>
    %cst_67 = arith.constant dense<0.000000e+00> : vector<16x2xf32>
    %127 = tpu.matmul %125, %126, %cst_67 {dimension_numbers = #tpu.dot_dimension_numbers<[1], [0], [0], [1], [0, 0, 1, 1], [], []>} : vector<16x128xf32>, vector<128x2xf32>, vector<16x2xf32> -> vector<16x2xf32>
    %c0_68 = arith.constant 0 : index
    %c0_69 = arith.constant 0 : index
    %128 = vector.load %arg9[%c0_68, %c0_69] : memref<1x2xf32, #tpu.memory_space<vmem>>, vector<1x2xf32>
    %129 = vector.broadcast %128 : vector<1x2xf32> to vector<16x2xf32>
    %130 = arith.addf %127, %129 : vector<16x2xf32>
    %c0_70 = arith.constant 0 : index
    %c0_71 = arith.constant 0 : index
    %131 = vector.load %arg10[%c0_70, %c0_71] : memref<16x2xf32, #tpu.memory_space<vmem>>, vector<16x2xf32>
    tpu.vector_store %arg10[%c0_70, %c0_71], %130 {strides = array<i32>} : memref<16x2xf32, #tpu.memory_space<vmem>>, vector<16x2xf32>,
    return
  }
  func.func @transform_0(%arg0: i32) -> (i32, i32, i32) {
    %c0_i32 = arith.constant 0 : i32
    %c0_i32_0 = arith.constant 0 : i32
    %c0_i32_1 = arith.constant 0 : i32
    return %c0_i32, %arg0, %c0_i32_0 : i32, i32, i32
  }
  func.func @transform_1(%arg0: i32) -> (i32, i32) {
    %c0_i32 = arith.constant 0 : i32
    %c0_i32_0 = arith.constant 0 : i32
    %c0_i32_1 = arith.constant 0 : i32
    return %c0_i32, %c0_i32_0 : i32, i32
  }
  func.func @transform_2(%arg0: i32) -> (i32, i32) {
    %c0_i32 = arith.constant 0 : i32
    %c0_i32_0 = arith.constant 0 : i32
    %c0_i32_1 = arith.constant 0 : i32
    return %c0_i32, %c0_i32_0 : i32, i32
  }
  func.func @transform_3(%arg0: i32) -> (i32, i32, i32) {
    %c0_i32 = arith.constant 0 : i32
    %c0_i32_0 = arith.constant 0 : i32
    %c0_i32_1 = arith.constant 0 : i32
    %c0_i32_2 = arith.constant 0 : i32
    return %c0_i32, %c0_i32_0, %c0_i32_1 : i32, i32, i32
  }
  func.func @transform_4(%arg0: i32) -> (i32, i32) {
    %c0_i32 = arith.constant 0 : i32
    %c0_i32_0 = arith.constant 0 : i32
    %c0_i32_1 = arith.constant 0 : i32
    return %c0_i32, %c0_i32_0 : i32, i32
  }
  func.func @transform_5(%arg0: i32) -> (i32, i32) {
    %c0_i32 = arith.constant 0 : i32
    %c0_i32_0 = arith.constant 0 : i32
    %c0_i32_1 = arith.constant 0 : i32
    return %c0_i32, %c0_i32_0 : i32, i32
  }
  func.func @transform_6(%arg0: i32) -> (i32, i32) {
    %c0_i32 = arith.constant 0 : i32
    %c0_i32_0 = arith.constant 0 : i32
    %c0_i32_1 = arith.constant 0 : i32
    return %c0_i32, %c0_i32_0 : i32, i32
  }
  func.func @transform_7(%arg0: i32) -> (i32, i32) {
    %c0_i32 = arith.constant 0 : i32
    %c0_i32_0 = arith.constant 0 : i32
    %c0_i32_1 = arith.constant 0 : i32
    return %c0_i32, %c0_i32_0 : i32, i32
  }
  func.func @transform_8(%arg0: i32) -> (i32, i32) {
    %c0_i32 = arith.constant 0 : i32
    %c0_i32_0 = arith.constant 0 : i32
    %c0_i32_1 = arith.constant 0 : i32
    return %c0_i32, %c0_i32_0 : i32, i32
  }
  func.func @transform_9(%arg0: i32) -> (i32, i32) {
    %c0_i32 = arith.constant 0 : i32
    %c0_i32_0 = arith.constant 0 : i32
    return %arg0, %c0_i32 : i32, i32
  }
}

</mosaic_0001>

<llo_original>
// kernel: incept_dilationconv_forward.1
$region0: #{incept_dilationconv_forward.1}
  #allocation0 [shape = 'u32[]', space=smem, size = 0x4, offset = 0x4, fixed_abs, tag = 'smem constant byte address 0x4 - core index']
  #allocation1 [shape = 'u32[144,128]{1,0:T(1,128)}', space=vmem, size = 0x12000, scoped, tag = 'internal scratch']
  %s0 = inlined_call_operand.vmem [shape: bf16[4,32,128], index: 0, kind: input, shape index: {}]
  %s1 = inlined_call_operand.vmem [shape: f32[16,128], index: 1, kind: input, shape index: {}]
  %s2 = inlined_call_operand.vmem [shape: f32[4,128], index: 2, kind: input, shape index: {}]
  %s3 = inlined_call_operand.vmem [shape: bf16[4,128,256], index: 3, kind: input, shape index: {}]
  %s4 = inlined_call_operand.vmem [shape: f32[1,256], index: 4, kind: input, shape index: {}]
  %s5 = inlined_call_operand.vmem [shape: bf16[256,128], index: 5, kind: input, shape index: {}]
  %s6 = inlined_call_operand.vmem [shape: f32[1,128], index: 6, kind: input, shape index: {}]
  %s7 = inlined_call_operand.vmem [shape: f32[128,2], index: 7, kind: input, shape index: {}]
  %s8 = inlined_call_operand.vmem [shape: f32[1,2], index: 8, kind: input, shape index: {}]
  %s9 = inlined_call_operand.vmem [shape: f32[32,2], index: 9, kind: output, shape index: {}]
  %s10 = sld [smem:[#allocation0]]
  $region110: #{incept_dilationconv_forward.1} parent=0
    _
  %s12 = ssub.s32 1, %s10
  %s13 = scalar_select 0, %s12, %s10
  $region1: #{incept_dilationconv_forward.1} parent=0
    #allocation2 [shape = 'u8[32768]{0}', space=vmem, size = 0x8000, scoped, tag = 'input window, operand 0']
    loop: start=0, step=1, limit=4
    $region2: #{incept_dilationconv_forward.1} parent=1 // loop_pre_header
      _
    $region3: #{incept_dilationconv_forward.1} parent=1 // loop_header
      %s15 = sphi 0, %s19
      %p16 = scmp.ge.s32.totalorder %s15, 4
      %s25 = sphi 0, %s27
      %s28 = sphi 0, %s25
      %s29 = sphi 0, %s28
      %s45 = sphi 0, %s29
      %s49 = sphi 0, %s49
      %s51 = sphi 0, %s49
      %s52 = sphi 0, %s51
      %s66 = sphi 0, %s52
      %s70 = sphi 0, %s70
      %s72 = sphi 0, %s70
      %s73 = sphi 0, %s72
      %s87 = sphi 0, %s73
      %s91 = sphi 0, %s91
      %s93 = sphi 0, %s91
      %s94 = sphi 0, %s93
      %s108 = sphi 0, %s94
      %s112 = sphi 0, %s112
      %s114 = sphi 0, %s112
      %s115 = sphi 0, %s114
      %s129 = sphi 0, %s115
      %s133 = sphi 0, %s133
      %s135 = sphi 0, %s133
      %s136 = sphi 0, %s135
      %s150 = sphi 0, %s136
      %s154 = sphi 0, %s154
      %s156 = sphi 0, %s154
      %s157 = sphi 0, %s156
      %s171 = sphi 0, %s157
      %s175 = sphi 0, %s175
      %s177 = sphi 0, %s175
      %s178 = sphi 0, %s177
      %s192 = sphi 0, %s178
      %s196 = sphi 0, %s196
      %s198 = sphi 0, %s196
      %s199 = sphi 0, %s198
      %s213 = sphi 0, %s199
      %s219 = sphi 0, %s221
      %s222 = sphi 0, %s219
      %s223 = sphi 0, %s222
      %s239 = sphi 0, %s223
    $region4: #{incept_dilationconv_forward.1} parent=1 // loop_header_branch
      %18 = sbr.rel (%p16) target = $region8
    $region5: #{incept_dilationconv_forward.1} parent=1 // loop_body
      %s20 = ssub.s32 %s15, 1
      %s21 = ssub.s32 %s15, 2
      %s22 = sadd.s32 %s15, 1
      %s23 = ssub.s32 %s15, %s22
      %p24 = scmp.eq.s32.totalorder %s23, 0
      %s26 = sadd.s32 %s25, 1
      %s27 = scalar_select %p24, %s25, %s26
      %p30 = pneg %p24
      %p31 = scmp.eq.s32.totalorder %s15, 1
      %p32 = por %p30, %p31
      %p33 = scmp.ne.s32.totalorder %s25, %s28
      %p34 = scmp.eq.s32.totalorder %s15, 0
      %p35 = por %p33, %p34
      %p36 = scmp.ne.s32.totalorder %s25, %s28
      %p37 = scmp.eq.s32.totalorder %s20, 1
      %p38 = por %p36, %p37
      %p39 = scmp.ne.s32.totalorder %s28, %s29
      %p40 = scmp.eq.s32.totalorder %s20, 0
      %p41 = por %p39, %p40
      %p42 = scmp.ne.s32.totalorder %s28, %s29
      %p43 = scmp.eq.s32.totalorder %s21, 1
      %p44 = por %p42, %p43
      %p46 = scmp.ne.s32.totalorder %s29, %s45
      %p47 = scmp.eq.s32.totalorder %s21, 0
      %p48 = por %p46, %p47
      %s50 = sadd.s32 %s49, 1
      %p53 = scmp.eq.s32.totalorder %s15, 1
      %p54 = scmp.ne.s32.totalorder %s49, %s51
      %p55 = scmp.eq.s32.totalorder %s15, 0
      %p56 = por %p54, %p55
      %p57 = scmp.ne.s32.totalorder %s49, %s51
      %p58 = scmp.eq.s32.totalorder %s20, 1
      %p59 = por %p57, %p58
      %p60 = scmp.ne.s32.totalorder %s51, %s52
      %p61 = scmp.eq.s32.totalorder %s20, 0
      %p62 = por %p60, %p61
      %p63 = scmp.ne.s32.totalorder %s51, %s52
      %p64 = scmp.eq.s32.totalorder %s21, 1
      %p65 = por %p63, %p64
      %p67 = scmp.ne.s32.totalorder %s52, %s66
      %p68 = scmp.eq.s32.totalorder %s21, 0
      %p69 = por %p67, %p68
      %s71 = sadd.s32 %s70, 1
      %p74 = scmp.eq.s32.totalorder %s15, 1
      %p75 = scmp.ne.s32.totalorder %s70, %s72
      %p76 = scmp.eq.s32.totalorder %s15, 0
      %p77 = por %p75, %p76
      %p78 = scmp.ne.s32.totalorder %s70, %s72
      %p79 = scmp.eq.s32.totalorder %s20, 1
      %p80 = por %p78, %p79
      %p81 = scmp.ne.s32.totalorder %s72, %s73
      %p82 = scmp.eq.s32.totalorder %s20, 0
      %p83 = por %p81, %p82
      %p84 = scmp.ne.s32.totalorder %s72, %s73
      %p85 = scmp.eq.s32.totalorder %s21, 1
      %p86 = por %p84, %p85
      %p88 = scmp.ne.s32.totalorder %s73, %s87
      %p89 = scmp.eq.s32.totalorder %s21, 0
      %p90 = por %p88, %p89
      %s92 = sadd.s32 %s91, 1
      %p95 = scmp.eq.s32.totalorder %s15, 1
      %p96 = scmp.ne.s32.totalorder %s91, %s93
      %p97 = scmp.eq.s32.totalorder %s15, 0
      %p98 = por %p96, %p97
      %p99 = scmp.ne.s32.totalorder %s91, %s93
      %p100 = scmp.eq.s32.totalorder %s20, 1
      %p101 = por %p99, %p100
      %p102 = scmp.ne.s32.totalorder %s93, %s94
      %p103 = scmp.eq.s32.totalorder %s20, 0
      %p104 = por %p102, %p103
      %p105 = scmp.ne.s32.totalorder %s93, %s94
      %p106 = scmp.eq.s32.totalorder %s21, 1
      %p107 = por %p105, %p106
      %p109 = scmp.ne.s32.totalorder %s94, %s108
      %p110 = scmp.eq.s32.totalorder %s21, 0
      %p111 = por %p109, %p110
      %s113 = sadd.s32 %s112, 1
      %p116 = scmp.eq.s32.totalorder %s15, 1
      %p117 = scmp.ne.s32.totalorder %s112, %s114
      %p118 = scmp.eq.s32.totalorder %s15, 0
      %p119 = por %p117, %p118
      %p120 = scmp.ne.s32.totalorder %s112, %s114
      %p121 = scmp.eq.s32.totalorder %s20, 1
      %p122 = por %p120, %p121
      %p123 = scmp.ne.s32.totalorder %s114, %s115
      %p124 = scmp.eq.s32.totalorder %s20, 0
      %p125 = por %p123, %p124
      %p126 = scmp.ne.s32.totalorder %s114, %s115
      %p127 = scmp.eq.s32.totalorder %s21, 1
      %p128 = por %p126, %p127
      %p130 = scmp.ne.s32.totalorder %s115, %s129
      %p131 = scmp.eq.s32.totalorder %s21, 0
      %p132 = por %p130, %p131
      %s134 = sadd.s32 %s133, 1
      %p137 = scmp.eq.s32.totalorder %s15, 1
      %p138 = scmp.ne.s32.totalorder %s133, %s135
      %p139 = scmp.eq.s32.totalorder %s15, 0
      %p140 = por %p138, %p139
      %p141 = scmp.ne.s32.totalorder %s133, %s135
      %p142 = scmp.eq.s32.totalorder %s20, 1
      %p143 = por %p141, %p142
      %p144 = scmp.ne.s32.totalorder %s135, %s136
      %p145 = scmp.eq.s32.totalorder %s20, 0
      %p146 = por %p144, %p145
      %p147 = scmp.ne.s32.totalorder %s135, %s136
      %p148 = scmp.eq.s32.totalorder %s21, 1
      %p149 = por %p147, %p148
      %p151 = scmp.ne.s32.totalorder %s136, %s150
      %p152 = scmp.eq.s32.totalorder %s21, 0
      %p153 = por %p151, %p152
      %s155 = sadd.s32 %s154, 1
      %p158 = scmp.eq.s32.totalorder %s15, 1
      %p159 = scmp.ne.s32.totalorder %s154, %s156
      %p160 = scmp.eq.s32.totalorder %s15, 0
      %p161 = por %p159, %p160
      %p162 = scmp.ne.s32.totalorder %s154, %s156
      %p163 = scmp.eq.s32.totalorder %s20, 1
      %p164 = por %p162, %p163
      %p165 = scmp.ne.s32.totalorder %s156, %s157
      %p166 = scmp.eq.s32.totalorder %s20, 0
      %p167 = por %p165, %p166
      %p168 = scmp.ne.s32.totalorder %s156, %s157
      %p169 = scmp.eq.s32.totalorder %s21, 1
      %p170 = por %p168, %p169
      %p172 = scmp.ne.s32.totalorder %s157, %s171
      %p173 = scmp.eq.s32.totalorder %s21, 0
      %p174 = por %p172, %p173
      %s176 = sadd.s32 %s175, 1
      %p179 = scmp.eq.s32.totalorder %s15, 1
      %p180 = scmp.ne.s32.totalorder %s175, %s177
      %p181 = scmp.eq.s32.totalorder %s15, 0
      %p182 = por %p180, %p181
      %p183 = scmp.ne.s32.totalorder %s175, %s177
      %p184 = scmp.eq.s32.totalorder %s20, 1
      %p185 = por %p183, %p184
      %p186 = scmp.ne.s32.totalorder %s177, %s178
      %p187 = scmp.eq.s32.totalorder %s20, 0
      %p188 = por %p186, %p187
      %p189 = scmp.ne.s32.totalorder %s177, %s178
      %p190 = scmp.eq.s32.totalorder %s21, 1
      %p191 = por %p189, %p190
      %p193 = scmp.ne.s32.totalorder %s178, %s192
      %p194 = scmp.eq.s32.totalorder %s21, 0
      %p195 = por %p193, %p194
      %s197 = sadd.s32 %s196, 1
      %p200 = scmp.eq.s32.totalorder %s15, 1
      %p201 = scmp.ne.s32.totalorder %s196, %s198
      %p202 = scmp.eq.s32.totalorder %s15, 0
      %p203 = por %p201, %p202
      %p204 = scmp.ne.s32.totalorder %s196, %s198
      %p205 = scmp.eq.s32.totalorder %s20, 1
      %p206 = por %p204, %p205
      %p207 = scmp.ne.s32.totalorder %s198, %s199
      %p208 = scmp.eq.s32.totalorder %s20, 0
      %p209 = por %p207, %p208
      %p210 = scmp.ne.s32.totalorder %s198, %s199
      %p211 = scmp.eq.s32.totalorder %s21, 1
      %p212 = por %p210, %p211
      %p214 = scmp.ne.s32.totalorder %s199, %s213
      %p215 = scmp.eq.s32.totalorder %s21, 0
      %p216 = por %p214, %p215
      %s217 = ssub.s32 %s15, %s22
      %p218 = scmp.eq.s32.totalorder %s217, 0
      %s220 = sadd.s32 %s219, 1
      %s221 = scalar_select %p218, %s219, %s220
      %p224 = pneg %p218
      %p225 = scmp.eq.s32.totalorder %s15, 1
      %p226 = por %p224, %p225
      %p227 = scmp.ne.s32.totalorder %s219, %s222
      %p228 = scmp.eq.s32.totalorder %s15, 0
      %p229 = por %p227, %p228
      %p230 = scmp.ne.s32.totalorder %s219, %s222
      %p231 = scmp.eq.s32.totalorder %s20, 1
      %p232 = por %p230, %p231
      %p233 = scmp.ne.s32.totalorder %s222, %s223
      %p234 = scmp.eq.s32.totalorder %s20, 0
      %p235 = por %p233, %p234
      %p236 = scmp.ne.s32.totalorder %s222, %s223
      %p237 = scmp.eq.s32.totalorder %s21, 1
      %p238 = por %p236, %p237
      %p240 = scmp.ne.s32.totalorder %s223, %s239
      %p241 = scmp.eq.s32.totalorder %s21, 0
      %p242 = por %p240, %p241
      %p243 = scmp.le.s32.totalorder 1, %s15
      %p244 = scmp.lt.s32.totalorder %s15, 3
      %p245 = pnand %p243, %p244
      %p246 = pneg %p245
      // Predicated region
      $region9: #{incept_dilationconv_forward.1} parent=5 // pred_check
        _
      $region10: #{incept_dilationconv_forward.1} parent=5 // pred_check_branch
        %248 = sbr.rel (%p245) target = $region12
      $region11: #{incept_dilationconv_forward.1} parent=5 // pred_region
        %s249 = ssub.s32 %s15, 1
        // Predicated region
        $region13: #{incept_dilationconv_forward.1} parent=11 // pred_check
          %p250 = pneg %p62
        $region14: #{incept_dilationconv_forward.1} parent=11 // pred_check_branch
          %252 = sbr.rel (%p250) target = $region16
        $region15: #{incept_dilationconv_forward.1} parent=11 // pred_region
          _
        $region16: #{incept_dilationconv_forward.1} parent=11 // pred_fallthru
          _
        // Predicated region
        $region17: #{incept_dilationconv_forward.1} parent=11 // pred_check
          %p253 = pneg %p83
        $region18: #{incept_dilationconv_forward.1} parent=11 // pred_check_branch
          %255 = sbr.rel (%p253) target = $region20
        $region19: #{incept_dilationconv_forward.1} parent=11 // pred_region
          _
        $region20: #{incept_dilationconv_forward.1} parent=11 // pred_fallthru
          _
        // Predicated region
        $region21: #{incept_dilationconv_forward.1} parent=11 // pred_check
          %p256 = pneg %p104
        $region22: #{incept_dilationconv_forward.1} parent=11 // pred_check_branch
          %258 = sbr.rel (%p256) target = $region24
        $region23: #{incept_dilationconv_forward.1} parent=11 // pred_region
          _
        $region24: #{incept_dilationconv_forward.1} parent=11 // pred_fallthru
          _
        // Predicated region
        $region25: #{incept_dilationconv_forward.1} parent=11 // pred_check
          %p259 = pneg %p125
        $region26: #{incept_dilationconv_forward.1} parent=11 // pred_check_branch
          %261 = sbr.rel (%p259) target = $region28
        $region27: #{incept_dilationconv_forward.1} parent=11 // pred_region
          _
        $region28: #{incept_dilationconv_forward.1} parent=11 // pred_fallthru
          _
        // Predicated region
        $region29: #{incept_dilationconv_forward.1} parent=11 // pred_check
          %p262 = pneg %p146
        $region30: #{incept_dilationconv_forward.1} parent=11 // pred_check_branch
          %264 = sbr.rel (%p262) target = $region32
        $region31: #{incept_dilationconv_forward.1} parent=11 // pred_region
          _
        $region32: #{incept_dilationconv_forward.1} parent=11 // pred_fallthru
          _
        // Predicated region
        $region33: #{incept_dilationconv_forward.1} parent=11 // pred_check
          %p265 = pneg %p167
        $region34: #{incept_dilationconv_forward.1} parent=11 // pred_check_branch
          %267 = sbr.rel (%p265) target = $region36
        $region35: #{incept_dilationconv_forward.1} parent=11 // pred_region
          _
        $region36: #{incept_dilationconv_forward.1} parent=11 // pred_fallthru
          _
        // Predicated region
        $region37: #{incept_dilationconv_forward.1} parent=11 // pred_check
          %p268 = pneg %p188
        $region38: #{incept_dilationconv_forward.1} parent=11 // pred_check_branch
          %270 = sbr.rel (%p268) target = $region40
        $region39: #{incept_dilationconv_forward.1} parent=11 // pred_region
          _
        $region40: #{incept_dilationconv_forward.1} parent=11 // pred_fallthru
          _
        // Predicated region
        $region41: #{incept_dilationconv_forward.1} parent=11 // pred_check
          %p271 = pneg %p209
        $region42: #{incept_dilationconv_forward.1} parent=11 // pred_check_branch
          %273 = sbr.rel (%p271) target = $region44
        $region43: #{incept_dilationconv_forward.1} parent=11 // pred_region
          _
        $region44: #{incept_dilationconv_forward.1} parent=11 // pred_fallthru
          _
      $region12: #{incept_dilationconv_forward.1} parent=5 // pred_fallthru
        _
      %p274 = scmp.lt.s32.totalorder %s15, 2
      // Predicated region
      $region45: #{incept_dilationconv_forward.1} parent=5 // pred_check
        %p275 = pneg %p274
      $region46: #{incept_dilationconv_forward.1} parent=5 // pred_check_branch
        %277 = sbr.rel (%p275) target = $region48
      $region47: #{incept_dilationconv_forward.1} parent=5 // pred_region
        // Predicated region
        $region49: #{incept_dilationconv_forward.1} parent=47 // pred_check
          %p278 = pneg %p35
        $region50: #{incept_dilationconv_forward.1} parent=47 // pred_check_branch
          %280 = sbr.rel (%p278) target = $region52
        $region51: #{incept_dilationconv_forward.1} parent=47 // pred_region
          %s281 = sand.u32 %s25, 1
          %s282 = sand.u32 %s25, 1
          %s283 = smul.addr %s282, 32
          %s284 = scalar_lea.vmem [#allocation2], %s283
          %s285 = smul.u32 2, %s15
          %s286 = smul.addr %s285, 4
          %s287 = scalar_lea.vmem %s0, %s286
          // Predicated region
          $region53: #{incept_dilationconv_forward.1} parent=51 // pred_check
            _
          $region54: #{incept_dilationconv_forward.1} parent=51 // pred_check_branch
            %289 = sbr.rel (0) target = $region56
          $region55: #{incept_dilationconv_forward.1} parent=51 // pred_region
            // Predicated region
            $region57: #{incept_dilationconv_forward.1} parent=55 // pred_check
              _
            $region58: #{incept_dilationconv_forward.1} parent=55 // pred_check_branch
              %291 = sbr.rel target = $region60
            $region59: #{incept_dilationconv_forward.1} parent=55 // pred_region
              // Predicated region
              $region72: #{incept_dilationconv_forward.1} parent=59 // pred_check
                _
              $region73: #{incept_dilationconv_forward.1} parent=59 // pred_check_branch
                %320 = sbr.rel (0) target = $region75
              $region74: #{incept_dilationconv_forward.1} parent=59 // pred_region
                loop: start=0, step=1, limit=1
                $region76: #{incept_dilationconv_forward.1} parent=74 // loop_pre_header
                  _
                $region77: #{incept_dilationconv_forward.1} parent=74 // loop_header
                  %s322 = sphi 0, %s326
                  %p323 = scmp.ge.s32.totalorder %s322, 1
                  %s327 = sphi %s287, %s287
                  %s328 = sphi %s284, %s284
                $region78: #{incept_dilationconv_forward.1} parent=74 // loop_header_branch
                  %325 = sbr.rel (%p323) target = $region82
                $region79: #{incept_dilationconv_forward.1} parent=74 // loop_body
                  _
                $region80: #{incept_dilationconv_forward.1} parent=74 // loop_footer
                  %s326 = sadd.s32 1, %s322
                $region81: #{incept_dilationconv_forward.1} parent=74 // loop_footer_branch
                  %321 = sbr.rel target = $region77
                $region82: #{incept_dilationconv_forward.1} parent=74 // loop_exit
                  _
                loop: start=0, step=1, limit=1
                $region83: #{incept_dilationconv_forward.1} parent=74 // loop_pre_header
                  _
                $region84: #{incept_dilationconv_forward.1} parent=74 // loop_header
                  %s331 = sphi 0, %s335
                  %p332 = scmp.ge.s32.totalorder %s331, 1
                  %s336 = sphi %s287, %s287
                  %s337 = sphi %s284, %s284
                $region85: #{incept_dilationconv_forward.1} parent=74 // loop_header_branch
                  %334 = sbr.rel (%p332) target = $region89
                $region86: #{incept_dilationconv_forward.1} parent=74 // loop_body
                  %v338 = vld [vmem:[%s336] sm:$0xf]
                  %339 = vst [vmem:[%s337] sm:$0xf] %v338
                  %v340 = vld [vmem:[%s336 + $0x4] sm:$0xf]
                  %341 = vst [vmem:[%s337 + $0x4] sm:$0xf] %v340
                  %v342 = vld [vmem:[%s336 + $0x10] sm:$0xf]
                  %343 = vst [vmem:[%s337 + $0x8] sm:$0xf] %v342
                  %v344 = vld [vmem:[%s336 + $0x14] sm:$0xf]
                  %345 = vst [vmem:[%s337 + $0xc] sm:$0xf] %v344
                  %v346 = vld [vmem:[%s336 + $0x20] sm:$0xf]
                  %347 = vst [vmem:[%s337 + $0x10] sm:$0xf] %v346
                  %v348 = vld [vmem:[%s336 + $0x24] sm:$0xf]
                  %349 = vst [vmem:[%s337 + $0x14] sm:$0xf] %v348
                  %v350 = vld [vmem:[%s336 + $0x30] sm:$0xf]
                  %351 = vst [vmem:[%s337 + $0x18] sm:$0xf] %v350
                  %v352 = vld [vmem:[%s336 + $0x34] sm:$0xf]
                  %353 = vst [vmem:[%s337 + $0x1c] sm:$0xf] %v352
                $region87: #{incept_dilationconv_forward.1} parent=74 // loop_footer
                  %s335 = sadd.s32 1, %s331
                $region88: #{incept_dilationconv_forward.1} parent=74 // loop_footer_branch
                  %330 = sbr.rel target = $region84
                $region89: #{incept_dilationconv_forward.1} parent=74 // loop_exit
                  _
              $region75: #{incept_dilationconv_forward.1} parent=59 // pred_fallthru
                _
            $region60: #{incept_dilationconv_forward.1} parent=55 // pred_fallthru
              _
            // Predicated region
            $region61: #{incept_dilationconv_forward.1} parent=55 // pred_check
              _
            $region62: #{incept_dilationconv_forward.1} parent=55 // pred_check_branch
              %293 = sbr.rel (0) target = $region64
            $region63: #{incept_dilationconv_forward.1} parent=55 // pred_region
              loop: start=0, step=1, limit=1
              $region65: #{incept_dilationconv_forward.1} parent=63 // loop_pre_header
                _
              $region66: #{incept_dilationconv_forward.1} parent=63 // loop_header
                %s296 = sphi 0, %s300
                %p297 = scmp.ge.s32.totalorder %s296, 1
                %s301 = sphi %s287, %s287
                %s302 = sphi %s284, %s284
              $region67: #{incept_dilationconv_forward.1} parent=63 // loop_header_branch
                %299 = sbr.rel (%p297) target = $region71
              $region68: #{incept_dilationconv_forward.1} parent=63 // loop_body
                %v303 = vld [vmem:[%s301] sm:$0xf]
                %304 = vst [vmem:[%s302] sm:$0xf] %v303
                %v305 = vld [vmem:[%s301 + $0x4] sm:$0xf]
                %306 = vst [vmem:[%s302 + $0x4] sm:$0xf] %v305
                %v307 = vld [vmem:[%s301 + $0x10] sm:$0xf]
                %308 = vst [vmem:[%s302 + $0x8] sm:$0xf] %v307
                %v309 = vld [vmem:[%s301 + $0x14] sm:$0xf]
                %310 = vst [vmem:[%s302 + $0xc] sm:$0xf] %v309
                %v311 = vld [vmem:[%s301 + $0x20] sm:$0xf]
                %312 = vst [vmem:[%s302 + $0x10] sm:$0xf] %v311
                %v313 = vld [vmem:[%s301 + $0x24] sm:$0xf]
                %314 = vst [vmem:[%s302 + $0x14] sm:$0xf] %v313
                %v315 = vld [vmem:[%s301 + $0x30] sm:$0xf]
                %316 = vst [vmem:[%s302 + $0x18] sm:$0xf] %v315
                %v317 = vld [vmem:[%s301 + $0x34] sm:$0xf]
                %318 = vst [vmem:[%s302 + $0x1c] sm:$0xf] %v317
              $region69: #{incept_dilationconv_forward.1} parent=63 // loop_footer
                %s300 = sadd.s32 1, %s296
              $region70: #{incept_dilationconv_forward.1} parent=63 // loop_footer_branch
                %295 = sbr.rel target = $region66
              $region71: #{incept_dilationconv_forward.1} parent=63 // loop_exit
                _
            $region64: #{incept_dilationconv_forward.1} parent=55 // pred_fallthru
              _
          $region56: #{incept_dilationconv_forward.1} parent=51 // pred_fallthru
            _
          %354 = vnop
        $region52: #{incept_dilationconv_forward.1} parent=47 // pred_fallthru
          _
      $region48: #{incept_dilationconv_forward.1} parent=5 // pred_fallthru
        _
      %p355 = scmp.le.s32.totalorder 1, %s15
      %p356 = scmp.lt.s32.totalorder %s15, 3
      %p357 = pnand %p355, %p356
      %p358 = pneg %p357
      // Predicated region
      $region90: #{incept_dilationconv_forward.1} parent=5 // pred_check
        _
      $region91: #{incept_dilationconv_forward.1} parent=5 // pred_check_branch
        %360 = sbr.rel (%p357) target = $region93
      $region92: #{incept_dilationconv_forward.1} parent=5 // pred_region
        %s361 = ssub.s32 %s15, 1
        %s362 = sand.u32 %s28, 1
        %s363 = sand.u32 %s28, 1
        %s364 = smul.addr %s363, 32
        %s365 = scalar_lea.vmem [#allocation2], %s364
        // Predicated region
        $region94: #{incept_dilationconv_forward.1} parent=92 // pred_check
          %p366 = pneg %p41
        $region95: #{incept_dilationconv_forward.1} parent=92 // pred_check_branch
          %368 = sbr.rel (%p366) target = $region97
        $region96: #{incept_dilationconv_forward.1} parent=92 // pred_region
          _
        $region97: #{incept_dilationconv_forward.1} parent=92 // pred_fallthru
          _
        %s369 = sand.u32 %s28, 1
        %s370 = sand.u32 %s28, 1
        %s371 = smul.addr %s370, 32
        %s372 = scalar_lea.vmem [#allocation2], %s371
        %p373 = pneg %p41
        %p374 = pneg %p38
        %p375 = pneg %p62
        %p376 = pneg %p59
        %p377 = pneg %p83
        %p378 = pneg %p80
        %p379 = pneg %p104
        %p380 = pneg %p101
        %p381 = pneg %p125
        %p382 = pneg %p122
        %p383 = pneg %p146
        %p384 = pneg %p143
        %p385 = pneg %p167
        %p386 = pneg %p164
        %p387 = pneg %p188
        %p388 = pneg %p185
        %p389 = pneg %p209
        %p390 = pneg %p206
        %p391 = pneg %p235
        %p392 = pneg %p232
        %s393 = smul.u32 2, %s20
        %p394 = scmp.lt.s32.totalorder %s393, 3
        %s395 = scalar_select %p394, %s393, 3
        %s396 = smul.addr %s395, 8
        %s397 = scalar_lea.vmem %s9, %s396
        %s398 = smul.u32 2, %s20
        %s399 = smul.u32 2, %s20
        %p400 = scmp.lt.s32.totalorder %s399, 3
        %s401 = scalar_select %p400, %s399, 3
        %s402 = smul.addr %s401, 8
        %s403 = scalar_lea.vmem %s9, %s402
        %s404 = smul.u32 2, %s20
        %v406 = vld [vmem:[%s365] sm:$0xf]
        %v407 = vld [vmem:[%s365 + $0x4] sm:$0xf]
        %v408 = vunpack.c.l.bf16 %v406
        %v409 = vunpack.c.l.bf16 %v407
        %s410 = scalar_lea.vmem %s365, 8 [#allocation2]
        %v411 = vld [vmem:[%s410] sm:$0xf]
        %v412 = vld [vmem:[%s410 + $0x4] sm:$0xf]
        %v413 = vunpack.c.l.bf16 %v411
        %v414 = vunpack.c.l.bf16 %v412
        %s415 = scalar_lea.vmem %s365, 16 [#allocation2]
        %v416 = vld [vmem:[%s415] sm:$0xf]
        %v417 = vld [vmem:[%s415 + $0x4] sm:$0xf]
        %v418 = vunpack.c.l.bf16 %v416
        %v419 = vunpack.c.l.bf16 %v417
        %s420 = scalar_lea.vmem %s365, 24 [#allocation2]
        %v421 = vld [vmem:[%s420] sm:$0xf]
        %v422 = vld [vmem:[%s420 + $0x4] sm:$0xf]
        %v423 = vunpack.c.l.bf16 %v421
        %v424 = vunpack.c.l.bf16 %v422
        %v425 = vld [vmem:[%s2] sm:$0x1]
        %v426 = vld [vmem:[%s1] sm:$0x1]
        %v427 = vlaneseq
        %v428 = vshrl.u32 %v427, 7
        %v429 = vsub.s32 0, %v428
        %v430 = vrot.slane %v426, %v429
        %v431 = vmul.f32 %v408, %v430
        %v432 = vmul.f32 %v409, %v430
        %v433 = vlaneseq
        %v434 = vshrl.u32 %v433, 7
        %v435 = vsub.s32 0, %v434
        %v436 = vrot.slane %v425, %v435
        %v437 = vadd.f32 %v436, %v431
        %v438 = vadd.f32 %v436, %v432
        %v439 = vld [vmem:[%s1 + $0x1] sm:$0x1]
        %v440 = vlaneseq
        %v441 = vshrl.u32 %v440, 7
        %v442 = vsub.s32 0, %v441
        %v443 = vrot.slane %v439, %v442
        %v444 = vmul.f32 %v413, %v443
        %v445 = vmul.f32 %v414, %v443
        %v446 = vadd.f32 %v437, %v444
        %v447 = vadd.f32 %v438, %v445
        %v448 = vld [vmem:[%s1 + $0x2] sm:$0x1]
        %v449 = vlaneseq
        %v450 = vshrl.u32 %v449, 7
        %v451 = vsub.s32 0, %v450
        %v452 = vrot.slane %v448, %v451
        %v453 = vmul.f32 %v418, %v452
        %v454 = vmul.f32 %v419, %v452
        %v455 = vadd.f32 %v446, %v453
        %v456 = vadd.f32 %v447, %v454
        %v457 = vld [vmem:[%s1 + $0x3] sm:$0x1]
        %v458 = vlaneseq
        %v459 = vshrl.u32 %v458, 7
        %v460 = vsub.s32 0, %v459
        %v461 = vrot.slane %v457, %v460
        %v462 = vmul.f32 %v423, %v461
        %v463 = vmul.f32 %v424, %v461
        %v464 = vadd.f32 %v455, %v462
        %v465 = vadd.f32 %v456, %v463
        %v466 = vmax.f32 %v464, 0.0
        %v467 = vmax.f32 %v465, 0.0
        %v468 = vpack.c.bf16 %v467, %v466
        %v469 = vld [vmem:[%s3] sm:$0xff]
        %v470 = vld [vmem:[%s3 + $0x8] sm:$0xff]
        %v471 = vld [vmem:[%s3 + $0x10] sm:$0xff]
        %v472 = vld [vmem:[%s3 + $0x18] sm:$0xff]
        %v473 = vld [vmem:[%s3 + $0x20] sm:$0xff]
        %v474 = vld [vmem:[%s3 + $0x28] sm:$0xff]
        %v475 = vld [vmem:[%s3 + $0x30] sm:$0xff]
        %v476 = vld [vmem:[%s3 + $0x38] sm:$0xff]
        %v477 = vld [vmem:[%s3 + $0x40] sm:$0xff]
        %v478 = vld [vmem:[%s3 + $0x48] sm:$0xff]
        %v479 = vld [vmem:[%s3 + $0x50] sm:$0xff]
        %v480 = vld [vmem:[%s3 + $0x58] sm:$0xff]
        %v481 = vld [vmem:[%s3 + $0x60] sm:$0xff]
        %v482 = vld [vmem:[%s3 + $0x68] sm:$0xff]
        %v483 = vld [vmem:[%s3 + $0x70] sm:$0xff]
        %v484 = vld [vmem:[%s3 + $0x78] sm:$0xff]
        %v485 = vld [vmem:[%s2 + $0x1] sm:$0x1]
        %v486 = vld [vmem:[%s1 + $0x4] sm:$0x1]
        %v487 = vlaneseq
        %v488 = vshrl.u32 %v487, 7
        %v489 = vsub.s32 0, %v488
        %v490 = vrot.slane %v486, %v489
        %v491 = vmul.f32 %v408, %v490
        %v492 = vmul.f32 %v409, %v490
        %v493 = vlaneseq
        %v494 = vshrl.u32 %v493, 7
        %v495 = vsub.s32 0, %v494
        %v496 = vrot.slane %v485, %v495
        %v497 = vadd.f32 %v496, %v491
        %v498 = vadd.f32 %v496, %v492
        %v499 = vld [vmem:[%s1 + $0x5] sm:$0x1]
        %v500 = vlaneseq
        %v501 = vshrl.u32 %v500, 7
        %v502 = vsub.s32 0, %v501
        %v503 = vrot.slane %v499, %v502
        %v504 = vmul.f32 %v413, %v503
        %v505 = vmul.f32 %v414, %v503
        %v506 = vadd.f32 %v497, %v504
        %v507 = vadd.f32 %v498, %v505
        %v508 = vld [vmem:[%s1 + $0x6] sm:$0x1]
        %v509 = vlaneseq
        %v510 = vshrl.u32 %v509, 7
        %v511 = vsub.s32 0, %v510
        %v512 = vrot.slane %v508, %v511
        %v513 = vmul.f32 %v418, %v512
        %v514 = vmul.f32 %v419, %v512
        %v515 = vadd.f32 %v506, %v513
        %v516 = vadd.f32 %v507, %v514
        %v517 = vld [vmem:[%s1 + $0x7] sm:$0x1]
        %v518 = vlaneseq
        %v519 = vshrl.u32 %v518, 7
        %v520 = vsub.s32 0, %v519
        %v521 = vrot.slane %v517, %v520
        %v522 = vmul.f32 %v423, %v521
        %v523 = vmul.f32 %v424, %v521
        %v524 = vadd.f32 %v515, %v522
        %v525 = vadd.f32 %v516, %v523
        %v526 = vmax.f32 %v524, 0.0
        %v527 = vmax.f32 %v525, 0.0
        %v528 = vpack.c.bf16 %v527, %v526
        %s529 = scalar_lea.vmem %s3, 128
        %v530 = vld [vmem:[%s529] sm:$0xff]
        %v531 = vld [vmem:[%s529 + $0x8] sm:$0xff]
        %v532 = vld [vmem:[%s529 + $0x10] sm:$0xff]
        %v533 = vld [vmem:[%s529 + $0x18] sm:$0xff]
        %v534 = vld [vmem:[%s529 + $0x20] sm:$0xff]
        %v535 = vld [vmem:[%s529 + $0x28] sm:$0xff]
        %v536 = vld [vmem:[%s529 + $0x30] sm:$0xff]
        %v537 = vld [vmem:[%s529 + $0x38] sm:$0xff]
        %v538 = vld [vmem:[%s529 + $0x40] sm:$0xff]
        %v539 = vld [vmem:[%s529 + $0x48] sm:$0xff]
        %v540 = vld [vmem:[%s529 + $0x50] sm:$0xff]
        %v541 = vld [vmem:[%s529 + $0x58] sm:$0xff]
        %v542 = vld [vmem:[%s529 + $0x60] sm:$0xff]
        %v543 = vld [vmem:[%s529 + $0x68] sm:$0xff]
        %v544 = vld [vmem:[%s529 + $0x70] sm:$0xff]
        %v545 = vld [vmem:[%s529 + $0x78] sm:$0xff]
        %v562 = vunpack.c.l.b16 %v530
        %v563 = vunpack.c.h.b16 %v530
        %v564 = vunpack.c.l.b16 %v531
        %v565 = vunpack.c.h.b16 %v531
        %v566 = vunpack.c.l.b16 %v532
        %v567 = vunpack.c.h.b16 %v532
        %v568 = vunpack.c.l.b16 %v533
        %v569 = vunpack.c.h.b16 %v533
        %v570 = vunpack.c.l.b16 %v534
        %v571 = vunpack.c.h.b16 %v534
        %v572 = vunpack.c.l.b16 %v535
        %v573 = vunpack.c.h.b16 %v535
        %v574 = vunpack.c.l.b16 %v536
        %v575 = vunpack.c.h.b16 %v536
        %v576 = vunpack.c.l.b16 %v537
        %v577 = vunpack.c.h.b16 %v537
        %v578 = vunpack.c.l.b16 %v538
        %v579 = vunpack.c.h.b16 %v538
        %v580 = vunpack.c.l.b16 %v539
        %v581 = vunpack.c.h.b16 %v539
        %v582 = vunpack.c.l.b16 %v540
        %v583 = vunpack.c.h.b16 %v540
        %v584 = vunpack.c.l.b16 %v541
        %v585 = vunpack.c.h.b16 %v541
        %v586 = vunpack.c.l.b16 %v542
        %v587 = vunpack.c.h.b16 %v542
        %v588 = vunpack.c.l.b16 %v543
        %v589 = vunpack.c.h.b16 %v543
        %v590 = vunpack.c.l.b16 %v544
        %v591 = vunpack.c.h.b16 %v544
        %v592 = vunpack.c.l.b16 %v545
        %v593 = vunpack.c.h.b16 %v545
        %v594 = vpack.c.b16 %v564, %v562
        %v595 = vpack.c.b16 %v565, %v563
        %v596 = vpack.c.b16 %v568, %v566
        %v597 = vpack.c.b16 %v569, %v567
        %v598 = vpack.c.b16 %v572, %v570
        %v599 = vpack.c.b16 %v573, %v571
        %v600 = vpack.c.b16 %v576, %v574
        %v601 = vpack.c.b16 %v577, %v575
        %v602 = vpack.c.b16 %v580, %v578
        %v603 = vpack.c.b16 %v581, %v579
        %v604 = vpack.c.b16 %v584, %v582
        %v605 = vpack.c.b16 %v585, %v583
        %v606 = vpack.c.b16 %v588, %v586
        %v607 = vpack.c.b16 %v589, %v587
        %v608 = vpack.c.b16 %v592, %v590
        %v609 = vpack.c.b16 %v593, %v591
        %626 = vmatprep.subr.bf16.mxu0 %v595
        %627 = vmatpush1.bf16.msra.mxu0 %v594
        %628 = vmatprep.subr.bf16.mxu0 %v597
        %629 = vmatpush1.bf16.msra.mxu0 %v596
        %630 = vmatprep.subr.bf16.mxu0 %v599
        %631 = vmatpush1.bf16.msra.mxu0 %v598
        %632 = vmatprep.subr.bf16.mxu0 %v601
        %633 = vmatpush1.bf16.msra.mxu0 %v600
        %634 = vmatprep.subr.bf16.mxu0 %v603
        %635 = vmatpush1.bf16.msra.mxu0 %v602
        %636 = vmatprep.subr.bf16.mxu0 %v605
        %637 = vmatpush1.bf16.msra.mxu0 %v604
        %638 = vmatprep.subr.bf16.mxu0 %v607
        %639 = vmatpush1.bf16.msra.mxu0 %v606
        %640 = vmatprep.subr.bf16.mxu0 %v609
        %641 = vmatpush1.bf16.msra.mxu0 %v608
        %642 = vmatprep.subr.bf16.mxu0 0
        %643 = vmatpush1.bf16.msra.mxu0 0
        %644 = vmatprep.subr.bf16.mxu0 0
        %645 = vmatpush1.bf16.msra.mxu0 0
        %646 = vmatprep.subr.bf16.mxu0 0
        %647 = vmatpush1.bf16.msra.mxu0 0
        %648 = vmatprep.subr.bf16.mxu0 0
        %649 = vmatpush1.bf16.msra.mxu0 0
        %650 = vmatprep.subr.bf16.mxu0 0
        %651 = vmatpush1.bf16.msra.mxu0 0
        %652 = vmatprep.subr.bf16.mxu0 0
        %653 = vmatpush1.bf16.msra.mxu0 0
        %654 = vmatprep.subr.bf16.mxu0 0
        %655 = vmatpush1.bf16.msra.mxu0 0
        %656 = vmatprep.subr.bf16.mxu0 0
        %657 = vmatpush1.bf16.msra.mxu0 0
        %658 = vmatprep.mubr.bf16.mxu0 0
        %659 = vmatmul.mubr.bf16.gmra.mrb[0].mxu0 %v528
        %v660 = vpop.f32.mrb[0].mxu0
        %v661 = vadd.f32 0.0, %v660
        %v662 = vpop.f32.mrb[0].mxu0
        %v663 = vadd.f32 0.0, %v662
        %v664 = vpop.f32.mrb[0].mxu0
        %v665 = vadd.f32 0.0, %v664
        %v666 = vpop.f32.mrb[0].mxu0
        %v667 = vadd.f32 0.0, %v666
        %668 = vdwg.mxu0
        %v685 = vunpack.c.l.b16 %v469
        %v686 = vunpack.c.h.b16 %v469
        %v687 = vunpack.c.l.b16 %v470
        %v688 = vunpack.c.h.b16 %v470
        %v689 = vunpack.c.l.b16 %v471
        %v690 = vunpack.c.h.b16 %v471
        %v691 = vunpack.c.l.b16 %v472
        %v692 = vunpack.c.h.b16 %v472
        %v693 = vunpack.c.l.b16 %v473
        %v694 = vunpack.c.h.b16 %v473
        %v695 = vunpack.c.l.b16 %v474
        %v696 = vunpack.c.h.b16 %v474
        %v697 = vunpack.c.l.b16 %v475
        %v698 = vunpack.c.h.b16 %v475
        %v699 = vunpack.c.l.b16 %v476
        %v700 = vunpack.c.h.b16 %v476
        %v701 = vunpack.c.l.b16 %v477
        %v702 = vunpack.c.h.b16 %v477
        %v703 = vunpack.c.l.b16 %v478
        %v704 = vunpack.c.h.b16 %v478
        %v705 = vunpack.c.l.b16 %v479
        %v706 = vunpack.c.h.b16 %v479
        %v707 = vunpack.c.l.b16 %v480
        %v708 = vunpack.c.h.b16 %v480
        %v709 = vunpack.c.l.b16 %v481
        %v710 = vunpack.c.h.b16 %v481
        %v711 = vunpack.c.l.b16 %v482
        %v712 = vunpack.c.h.b16 %v482
        %v713 = vunpack.c.l.b16 %v483
        %v714 = vunpack.c.h.b16 %v483
        %v715 = vunpack.c.l.b16 %v484
        %v716 = vunpack.c.h.b16 %v484
        %v717 = vpack.c.b16 %v687, %v685
        %v718 = vpack.c.b16 %v688, %v686
        %v719 = vpack.c.b16 %v691, %v689
        %v720 = vpack.c.b16 %v692, %v690
        %v721 = vpack.c.b16 %v695, %v693
        %v722 = vpack.c.b16 %v696, %v694
        %v723 = vpack.c.b16 %v699, %v697
        %v724 = vpack.c.b16 %v700, %v698
        %v725 = vpack.c.b16 %v703, %v701
        %v726 = vpack.c.b16 %v704, %v702
        %v727 = vpack.c.b16 %v707, %v705
        %v728 = vpack.c.b16 %v708, %v706
        %v729 = vpack.c.b16 %v711, %v709
        %v730 = vpack.c.b16 %v712, %v710
        %v731 = vpack.c.b16 %v715, %v713
        %v732 = vpack.c.b16 %v716, %v714
        %749 = vmatprep.subr.bf16.mxu0 %v718
        %750 = vmatpush1.bf16.msra.mxu0 %v717
        %751 = vmatprep.subr.bf16.mxu0 %v720
        %752 = vmatpush1.bf16.msra.mxu0 %v719
        %753 = vmatprep.subr.bf16.mxu0 %v722
        %754 = vmatpush1.bf16.msra.mxu0 %v721
        %755 = vmatprep.subr.bf16.mxu0 %v724
        %756 = vmatpush1.bf16.msra.mxu0 %v723
        %757 = vmatprep.subr.bf16.mxu0 %v726
        %758 = vmatpush1.bf16.msra.mxu0 %v725
        %759 = vmatprep.subr.bf16.mxu0 %v728
        %760 = vmatpush1.bf16.msra.mxu0 %v727
        %761 = vmatprep.subr.bf16.mxu0 %v730
        %762 = vmatpush1.bf16.msra.mxu0 %v729
        %763 = vmatprep.subr.bf16.mxu0 %v732
        %764 = vmatpush1.bf16.msra.mxu0 %v731
        %765 = vmatprep.subr.bf16.mxu0 0
        %766 = vmatpush1.bf16.msra.mxu0 0
        %767 = vmatprep.subr.bf16.mxu0 0
        %768 = vmatpush1.bf16.msra.mxu0 0
        %769 = vmatprep.subr.bf16.mxu0 0
        %770 = vmatpush1.bf16.msra.mxu0 0
        %771 = vmatprep.subr.bf16.mxu0 0
        %772 = vmatpush1.bf16.msra.mxu0 0
        %773 = vmatprep.subr.bf16.mxu0 0
        %774 = vmatpush1.bf16.msra.mxu0 0
        %775 = vmatprep.subr.bf16.mxu0 0
        %776 = vmatpush1.bf16.msra.mxu0 0
        %777 = vmatprep.subr.bf16.mxu0 0
        %778 = vmatpush1.bf16.msra.mxu0 0
        %779 = vmatprep.subr.bf16.mxu0 0
        %780 = vmatpush1.bf16.msra.mxu0 0
        %781 = vmatprep.mubr.bf16.mxu0 0
        %782 = vmatmul.mubr.bf16.gmra.mrb[0].mxu0 %v468
        %v783 = vpop.f32.mrb[0].mxu0
        %v784 = vadd.f32 %v661, %v783
        %v785 = vpop.f32.mrb[0].mxu0
        %v786 = vadd.f32 %v663, %v785
        %v787 = vpop.f32.mrb[0].mxu0
        %v788 = vadd.f32 %v665, %v787
        %v789 = vpop.f32.mrb[0].mxu0
        %v790 = vadd.f32 %v667, %v789
        %791 = vdwg.mxu0
        %v792 = vld [vmem:[%s2 + $0x2] sm:$0x1]
        %v793 = vld [vmem:[%s1 + $0x8] sm:$0x1]
        %v794 = vlaneseq
        %v795 = vshrl.u32 %v794, 7
        %v796 = vsub.s32 0, %v795
        %v797 = vrot.slane %v793, %v796
        %v798 = vmul.f32 %v408, %v797
        %v799 = vmul.f32 %v409, %v797
        %v800 = vlaneseq
        %v801 = vshrl.u32 %v800, 7
        %v802 = vsub.s32 0, %v801
        %v803 = vrot.slane %v792, %v802
        %v804 = vadd.f32 %v803, %v798
        %v805 = vadd.f32 %v803, %v799
        %v806 = vld [vmem:[%s1 + $0x9] sm:$0x1]
        %v807 = vlaneseq
        %v808 = vshrl.u32 %v807, 7
        %v809 = vsub.s32 0, %v808
        %v810 = vrot.slane %v806, %v809
        %v811 = vmul.f32 %v413, %v810
        %v812 = vmul.f32 %v414, %v810
        %v813 = vadd.f32 %v804, %v811
        %v814 = vadd.f32 %v805, %v812
        %v815 = vld [vmem:[%s1 + $0xa] sm:$0x1]
        %v816 = vlaneseq
        %v817 = vshrl.u32 %v816, 7
        %v818 = vsub.s32 0, %v817
        %v819 = vrot.slane %v815, %v818
        %v820 = vmul.f32 %v418, %v819
        %v821 = vmul.f32 %v419, %v819
        %v822 = vadd.f32 %v813, %v820
        %v823 = vadd.f32 %v814, %v821
        %v824 = vld [vmem:[%s1 + $0xb] sm:$0x1]
        %v825 = vlaneseq
        %v826 = vshrl.u32 %v825, 7
        %v827 = vsub.s32 0, %v826
        %v828 = vrot.slane %v824, %v827
        %v829 = vmul.f32 %v423, %v828
        %v830 = vmul.f32 %v424, %v828
        %v831 = vadd.f32 %v822, %v829
        %v832 = vadd.f32 %v823, %v830
        %v833 = vmax.f32 %v831, 0.0
        %v834 = vmax.f32 %v832, 0.0
        %v835 = vpack.c.bf16 %v834, %v833
        %s836 = scalar_lea.vmem %s3, 256
        %v837 = vld [vmem:[%s836] sm:$0xff]
        %v838 = vld [vmem:[%s836 + $0x8] sm:$0xff]
        %v839 = vld [vmem:[%s836 + $0x10] sm:$0xff]
        %v840 = vld [vmem:[%s836 + $0x18] sm:$0xff]
        %v841 = vld [vmem:[%s836 + $0x20] sm:$0xff]
        %v842 = vld [vmem:[%s836 + $0x28] sm:$0xff]
        %v843 = vld [vmem:[%s836 + $0x30] sm:$0xff]
        %v844 = vld [vmem:[%s836 + $0x38] sm:$0xff]
        %v845 = vld [vmem:[%s836 + $0x40] sm:$0xff]
        %v846 = vld [vmem:[%s836 + $0x48] sm:$0xff]
        %v847 = vld [vmem:[%s836 + $0x50] sm:$0xff]
        %v848 = vld [vmem:[%s836 + $0x58] sm:$0xff]
        %v849 = vld [vmem:[%s836 + $0x60] sm:$0xff]
        %v850 = vld [vmem:[%s836 + $0x68] sm:$0xff]
        %v851 = vld [vmem:[%s836 + $0x70] sm:$0xff]
        %v852 = vld [vmem:[%s836 + $0x78] sm:$0xff]
        %v869 = vunpack.c.l.b16 %v837
        %v870 = vunpack.c.h.b16 %v837
        %v871 = vunpack.c.l.b16 %v838
        %v872 = vunpack.c.h.b16 %v838
        %v873 = vunpack.c.l.b16 %v839
        %v874 = vunpack.c.h.b16 %v839
        %v875 = vunpack.c.l.b16 %v840
        %v876 = vunpack.c.h.b16 %v840
        %v877 = vunpack.c.l.b16 %v841
        %v878 = vunpack.c.h.b16 %v841
        %v879 = vunpack.c.l.b16 %v842
        %v880 = vunpack.c.h.b16 %v842
        %v881 = vunpack.c.l.b16 %v843
        %v882 = vunpack.c.h.b16 %v843
        %v883 = vunpack.c.l.b16 %v844
        %v884 = vunpack.c.h.b16 %v844
        %v885 = vunpack.c.l.b16 %v845
        %v886 = vunpack.c.h.b16 %v845
        %v887 = vunpack.c.l.b16 %v846
        %v888 = vunpack.c.h.b16 %v846
        %v889 = vunpack.c.l.b16 %v847
        %v890 = vunpack.c.h.b16 %v847
        %v891 = vunpack.c.l.b16 %v848
        %v892 = vunpack.c.h.b16 %v848
        %v893 = vunpack.c.l.b16 %v849
        %v894 = vunpack.c.h.b16 %v849
        %v895 = vunpack.c.l.b16 %v850
        %v896 = vunpack.c.h.b16 %v850
        %v897 = vunpack.c.l.b16 %v851
        %v898 = vunpack.c.h.b16 %v851
        %v899 = vunpack.c.l.b16 %v852
        %v900 = vunpack.c.h.b16 %v852
        %v901 = vpack.c.b16 %v871, %v869
        %v902 = vpack.c.b16 %v872, %v870
        %v903 = vpack.c.b16 %v875, %v873
        %v904 = vpack.c.b16 %v876, %v874
        %v905 = vpack.c.b16 %v879, %v877
        %v906 = vpack.c.b16 %v880, %v878
        %v907 = vpack.c.b16 %v883, %v881
        %v908 = vpack.c.b16 %v884, %v882
        %v909 = vpack.c.b16 %v887, %v885
        %v910 = vpack.c.b16 %v888, %v886
        %v911 = vpack.c.b16 %v891, %v889
        %v912 = vpack.c.b16 %v892, %v890
        %v913 = vpack.c.b16 %v895, %v893
        %v914 = vpack.c.b16 %v896, %v894
        %v915 = vpack.c.b16 %v899, %v897
        %v916 = vpack.c.b16 %v900, %v898
        %933 = vmatprep.subr.bf16.mxu0 %v902
        %934 = vmatpush1.bf16.msra.mxu0 %v901
        %935 = vmatprep.subr.bf16.mxu0 %v904
        %936 = vmatpush1.bf16.msra.mxu0 %v903
        %937 = vmatprep.subr.bf16.mxu0 %v906
        %938 = vmatpush1.bf16.msra.mxu0 %v905
        %939 = vmatprep.subr.bf16.mxu0 %v908
        %940 = vmatpush1.bf16.msra.mxu0 %v907
        %941 = vmatprep.subr.bf16.mxu0 %v910
        %942 = vmatpush1.bf16.msra.mxu0 %v909
        %943 = vmatprep.subr.bf16.mxu0 %v912
        %944 = vmatpush1.bf16.msra.mxu0 %v911
        %945 = vmatprep.subr.bf16.mxu0 %v914
        %946 = vmatpush1.bf16.msra.mxu0 %v913
        %947 = vmatprep.subr.bf16.mxu0 %v916
        %948 = vmatpush1.bf16.msra.mxu0 %v915
        %949 = vmatprep.subr.bf16.mxu0 0
        %950 = vmatpush1.bf16.msra.mxu0 0
        %951 = vmatprep.subr.bf16.mxu0 0
        %952 = vmatpush1.bf16.msra.mxu0 0
        %953 = vmatprep.subr.bf16.mxu0 0
        %954 = vmatpush1.bf16.msra.mxu0 0
        %955 = vmatprep.subr.bf16.mxu0 0
        %956 = vmatpush1.bf16.msra.mxu0 0
        %957 = vmatprep.subr.bf16.mxu0 0
        %958 = vmatpush1.bf16.msra.mxu0 0
        %959 = vmatprep.subr.bf16.mxu0 0
        %960 = vmatpush1.bf16.msra.mxu0 0
        %961 = vmatprep.subr.bf16.mxu0 0
        %962 = vmatpush1.bf16.msra.mxu0 0
        %963 = vmatprep.subr.bf16.mxu0 0
        %964 = vmatpush1.bf16.msra.mxu0 0
        %965 = vmatprep.mubr.bf16.mxu0 0
        %966 = vmatmul.mubr.bf16.gmra.mrb[0].mxu0 %v835
        %v967 = vpop.f32.mrb[0].mxu0
        %v968 = vadd.f32 0.0, %v967
        %v969 = vpop.f32.mrb[0].mxu0
        %v970 = vadd.f32 0.0, %v969
        %v971 = vpop.f32.mrb[0].mxu0
        %v972 = vadd.f32 0.0, %v971
        %v973 = vpop.f32.mrb[0].mxu0
        %v974 = vadd.f32 0.0, %v973
        %975 = vdwg.mxu0
        %v976 = vadd.f32 %v784, %v968
        %v977 = vadd.f32 %v786, %v970
        %v978 = vadd.f32 %v788, %v972
        %v979 = vadd.f32 %v790, %v974
        %v980 = vld [vmem:[%s2 + $0x3] sm:$0x1]
        %v981 = vld [vmem:[%s1 + $0xc] sm:$0x1]
        %v982 = vlaneseq
        %v983 = vshrl.u32 %v982, 7
        %v984 = vsub.s32 0, %v983
        %v985 = vrot.slane %v981, %v984
        %v986 = vmul.f32 %v408, %v985
        %v987 = vmul.f32 %v409, %v985
        %v988 = vlaneseq
        %v989 = vshrl.u32 %v988, 7
        %v990 = vsub.s32 0, %v989
        %v991 = vrot.slane %v980, %v990
        %v992 = vadd.f32 %v991, %v986
        %v993 = vadd.f32 %v991, %v987
        %v994 = vld [vmem:[%s1 + $0xd] sm:$0x1]
        %v995 = vlaneseq
        %v996 = vshrl.u32 %v995, 7
        %v997 = vsub.s32 0, %v996
        %v998 = vrot.slane %v994, %v997
        %v999 = vmul.f32 %v413, %v998
        %v1000 = vmul.f32 %v414, %v998
        %v1001 = vadd.f32 %v992, %v999
        %v1002 = vadd.f32 %v993, %v1000
        %v1003 = vld [vmem:[%s1 + $0xe] sm:$0x1]
        %v1004 = vlaneseq
        %v1005 = vshrl.u32 %v1004, 7
        %v1006 = vsub.s32 0, %v1005
        %v1007 = vrot.slane %v1003, %v1006
        %v1008 = vmul.f32 %v418, %v1007
        %v1009 = vmul.f32 %v419, %v1007
        %v1010 = vadd.f32 %v1001, %v1008
        %v1011 = vadd.f32 %v1002, %v1009
        %v1012 = vld [vmem:[%s1 + $0xf] sm:$0x1]
        %v1013 = vlaneseq
        %v1014 = vshrl.u32 %v1013, 7
        %v1015 = vsub.s32 0, %v1014
        %v1016 = vrot.slane %v1012, %v1015
        %v1017 = vmul.f32 %v423, %v1016
        %v1018 = vmul.f32 %v424, %v1016
        %v1019 = vadd.f32 %v1010, %v1017
        %v1020 = vadd.f32 %v1011, %v1018
        %v1021 = vmax.f32 %v1019, 0.0
        %v1022 = vmax.f32 %v1020, 0.0
        %v1023 = vpack.c.bf16 %v1022, %v1021
        %s1024 = scalar_lea.vmem %s3, 384
        %v1025 = vld [vmem:[%s1024] sm:$0xff]
        %v1026 = vld [vmem:[%s1024 + $0x8] sm:$0xff]
        %v1027 = vld [vmem:[%s1024 + $0x10] sm:$0xff]
        %v1028 = vld [vmem:[%s1024 + $0x18] sm:$0xff]
        %v1029 = vld [vmem:[%s1024 + $0x20] sm:$0xff]
        %v1030 = vld [vmem:[%s1024 + $0x28] sm:$0xff]
        %v1031 = vld [vmem:[%s1024 + $0x30] sm:$0xff]
        %v1032 = vld [vmem:[%s1024 + $0x38] sm:$0xff]
        %v1033 = vld [vmem:[%s1024 + $0x40] sm:$0xff]
        %v1034 = vld [vmem:[%s1024 + $0x48] sm:$0xff]
        %v1035 = vld [vmem:[%s1024 + $0x50] sm:$0xff]
        %v1036 = vld [vmem:[%s1024 + $0x58] sm:$0xff]
        %v1037 = vld [vmem:[%s1024 + $0x60] sm:$0xff]
        %v1038 = vld [vmem:[%s1024 + $0x68] sm:$0xff]
        %v1039 = vld [vmem:[%s1024 + $0x70] sm:$0xff]
        %v1040 = vld [vmem:[%s1024 + $0x78] sm:$0xff]
        %v1057 = vunpack.c.l.b16 %v1025
        %v1058 = vunpack.c.h.b16 %v1025
        %v1059 = vunpack.c.l.b16 %v1026
        %v1060 = vunpack.c.h.b16 %v1026
        %v1061 = vunpack.c.l.b16 %v1027
        %v1062 = vunpack.c.h.b16 %v1027
        %v1063 = vunpack.c.l.b16 %v1028
        %v1064 = vunpack.c.h.b16 %v1028
        %v1065 = vunpack.c.l.b16 %v1029
        %v1066 = vunpack.c.h.b16 %v1029
        %v1067 = vunpack.c.l.b16 %v1030
        %v1068 = vunpack.c.h.b16 %v1030
        %v1069 = vunpack.c.l.b16 %v1031
        %v1070 = vunpack.c.h.b16 %v1031
        %v1071 = vunpack.c.l.b16 %v1032
        %v1072 = vunpack.c.h.b16 %v1032
        %v1073 = vunpack.c.l.b16 %v1033
        %v1074 = vunpack.c.h.b16 %v1033
        %v1075 = vunpack.c.l.b16 %v1034
        %v1076 = vunpack.c.h.b16 %v1034
        %v1077 = vunpack.c.l.b16 %v1035
        %v1078 = vunpack.c.h.b16 %v1035
        %v1079 = vunpack.c.l.b16 %v1036
        %v1080 = vunpack.c.h.b16 %v1036
        %v1081 = vunpack.c.l.b16 %v1037
        %v1082 = vunpack.c.h.b16 %v1037
        %v1083 = vunpack.c.l.b16 %v1038
        %v1084 = vunpack.c.h.b16 %v1038
        %v1085 = vunpack.c.l.b16 %v1039
        %v1086 = vunpack.c.h.b16 %v1039
        %v1087 = vunpack.c.l.b16 %v1040
        %v1088 = vunpack.c.h.b16 %v1040
        %v1089 = vpack.c.b16 %v1059, %v1057
        %v1090 = vpack.c.b16 %v1060, %v1058
        %v1091 = vpack.c.b16 %v1063, %v1061
        %v1092 = vpack.c.b16 %v1064, %v1062
        %v1093 = vpack.c.b16 %v1067, %v1065
        %v1094 = vpack.c.b16 %v1068, %v1066
        %v1095 = vpack.c.b16 %v1071, %v1069
        %v1096 = vpack.c.b16 %v1072, %v1070
        %v1097 = vpack.c.b16 %v1075, %v1073
        %v1098 = vpack.c.b16 %v1076, %v1074
        %v1099 = vpack.c.b16 %v1079, %v1077
        %v1100 = vpack.c.b16 %v1080, %v1078
        %v1101 = vpack.c.b16 %v1083, %v1081
        %v1102 = vpack.c.b16 %v1084, %v1082
        %v1103 = vpack.c.b16 %v1087, %v1085
        %v1104 = vpack.c.b16 %v1088, %v1086
        %1121 = vmatprep.subr.bf16.mxu0 %v1090
        %1122 = vmatpush1.bf16.msra.mxu0 %v1089
        %1123 = vmatprep.subr.bf16.mxu0 %v1092
        %1124 = vmatpush1.bf16.msra.mxu0 %v1091
        %1125 = vmatprep.subr.bf16.mxu0 %v1094
        %1126 = vmatpush1.bf16.msra.mxu0 %v1093
        %1127 = vmatprep.subr.bf16.mxu0 %v1096
        %1128 = vmatpush1.bf16.msra.mxu0 %v1095
        %1129 = vmatprep.subr.bf16.mxu0 %v1098
        %1130 = vmatpush1.bf16.msra.mxu0 %v1097
        %1131 = vmatprep.subr.bf16.mxu0 %v1100
        %1132 = vmatpush1.bf16.msra.mxu0 %v1099
        %1133 = vmatprep.subr.bf16.mxu0 %v1102
        %1134 = vmatpush1.bf16.msra.mxu0 %v1101
        %1135 = vmatprep.subr.bf16.mxu0 %v1104
        %1136 = vmatpush1.bf16.msra.mxu0 %v1103
        %1137 = vmatprep.subr.bf16.mxu0 0
        %1138 = vmatpush1.bf16.msra.mxu0 0
        %1139 = vmatprep.subr.bf16.mxu0 0
        %1140 = vmatpush1.bf16.msra.mxu0 0
        %1141 = vmatprep.subr.bf16.mxu0 0
        %1142 = vmatpush1.bf16.msra.mxu0 0
        %1143 = vmatprep.subr.bf16.mxu0 0
        %1144 = vmatpush1.bf16.msra.mxu0 0
        %1145 = vmatprep.subr.bf16.mxu0 0
        %1146 = vmatpush1.bf16.msra.mxu0 0
        %1147 = vmatprep.subr.bf16.mxu0 0
        %1148 = vmatpush1.bf16.msra.mxu0 0
        %1149 = vmatprep.subr.bf16.mxu0 0
        %1150 = vmatpush1.bf16.msra.mxu0 0
        %1151 = vmatprep.subr.bf16.mxu0 0
        %1152 = vmatpush1.bf16.msra.mxu0 0
        %1153 = vmatprep.mubr.bf16.mxu0 0
        %1154 = vmatmul.mubr.bf16.gmra.mrb[0].mxu0 %v1023
        %v1155 = vpop.f32.mrb[0].mxu0
        %v1156 = vadd.f32 0.0, %v1155
        %v1157 = vpop.f32.mrb[0].mxu0
        %v1158 = vadd.f32 0.0, %v1157
        %v1159 = vpop.f32.mrb[0].mxu0
        %v1160 = vadd.f32 0.0, %v1159
        %v1161 = vpop.f32.mrb[0].mxu0
        %v1162 = vadd.f32 0.0, %v1161
        %1163 = vdwg.mxu0
        %v1164 = vadd.f32 %v976, %v1156
        %v1165 = vadd.f32 %v977, %v1158
        %v1166 = vadd.f32 %v978, %v1160
        %v1167 = vadd.f32 %v979, %v1162
        %v1168 = vld [vmem:[%s4] sm:$0x3]
        %v1170 = vlaneseq
        %v1171 = vshrl.u32 %v1170, 7
        %v1172 = vsub.s32 0, %v1171
        %v1173 = vrot.slane %v1168, %v1172
        %v1174 = vlaneseq
        %v1175 = vshrl.u32 %v1174, 7
        %v1176 = vsub.s32 1, %v1175
        %v1177 = vrot.slane %v1168, %v1176
        %v1180 = vadd.f32 %v1164, %v1173
        %v1181 = vadd.f32 %v1165, %v1177
        %v1182 = vadd.f32 %v1166, %v1173
        %v1183 = vadd.f32 %v1167, %v1177
        %v1184 = vmax.f32 %v1180, 0.0
        %v1185 = vmax.f32 %v1181, 0.0
        %v1186 = vmax.f32 %v1182, 0.0
        %v1187 = vmax.f32 %v1183, 0.0
        %v1188 = vpack.c.bf16 %v1186, %v1184
        %v1189 = vpack.c.bf16 %v1187, %v1185
        %v1190 = vld [vmem:[%s5] sm:$0xf]
        %v1191 = vld [vmem:[%s5 + $0x4] sm:$0xf]
        %v1192 = vld [vmem:[%s5 + $0x8] sm:$0xf]
        %v1193 = vld [vmem:[%s5 + $0xc] sm:$0xf]
        %v1194 = vld [vmem:[%s5 + $0x10] sm:$0xf]
        %v1195 = vld [vmem:[%s5 + $0x14] sm:$0xf]
        %v1196 = vld [vmem:[%s5 + $0x18] sm:$0xf]
        %v1197 = vld [vmem:[%s5 + $0x1c] sm:$0xf]
        %v1198 = vld [vmem:[%s5 + $0x20] sm:$0xf]
        %v1199 = vld [vmem:[%s5 + $0x24] sm:$0xf]
        %v1200 = vld [vmem:[%s5 + $0x28] sm:$0xf]
        %v1201 = vld [vmem:[%s5 + $0x2c] sm:$0xf]
        %v1202 = vld [vmem:[%s5 + $0x30] sm:$0xf]
        %v1203 = vld [vmem:[%s5 + $0x34] sm:$0xf]
        %v1204 = vld [vmem:[%s5 + $0x38] sm:$0xf]
        %v1205 = vld [vmem:[%s5 + $0x3c] sm:$0xf]
        %v1206 = vld [vmem:[%s5 + $0x40] sm:$0xf]
        %v1207 = vld [vmem:[%s5 + $0x44] sm:$0xf]
        %v1208 = vld [vmem:[%s5 + $0x48] sm:$0xf]
        %v1209 = vld [vmem:[%s5 + $0x4c] sm:$0xf]
        %v1210 = vld [vmem:[%s5 + $0x50] sm:$0xf]
        %v1211 = vld [vmem:[%s5 + $0x54] sm:$0xf]
        %v1212 = vld [vmem:[%s5 + $0x58] sm:$0xf]
        %v1213 = vld [vmem:[%s5 + $0x5c] sm:$0xf]
        %v1214 = vld [vmem:[%s5 + $0x60] sm:$0xf]
        %v1215 = vld [vmem:[%s5 + $0x64] sm:$0xf]
        %v1216 = vld [vmem:[%s5 + $0x68] sm:$0xf]
        %v1217 = vld [vmem:[%s5 + $0x6c] sm:$0xf]
        %v1218 = vld [vmem:[%s5 + $0x70] sm:$0xf]
        %v1219 = vld [vmem:[%s5 + $0x74] sm:$0xf]
        %v1220 = vld [vmem:[%s5 + $0x78] sm:$0xf]
        %v1221 = vld [vmem:[%s5 + $0x7c] sm:$0xf]
        %v1222 = vld [vmem:[%s6] sm:$0x1]
        %v1224 = vlaneseq
        %v1225 = vshrl.u32 %v1224, 7
        %v1226 = vsub.s32 0, %v1225
        %v1227 = vrot.slane %v1222, %v1226
        %v1261 = vunpack.c.l.b16 %v1190
        %v1262 = vunpack.c.l.b16 %v1191
        %v1263 = vunpack.c.l.b16 %v1192
        %v1264 = vunpack.c.l.b16 %v1193
        %v1265 = vunpack.c.l.b16 %v1194
        %v1266 = vunpack.c.l.b16 %v1195
        %v1267 = vunpack.c.l.b16 %v1196
        %v1268 = vunpack.c.l.b16 %v1197
        %v1269 = vunpack.c.l.b16 %v1198
        %v1270 = vunpack.c.l.b16 %v1199
        %v1271 = vunpack.c.l.b16 %v1200
        %v1272 = vunpack.c.l.b16 %v1201
        %v1273 = vunpack.c.l.b16 %v1202
        %v1274 = vunpack.c.l.b16 %v1203
        %v1275 = vunpack.c.l.b16 %v1204
        %v1276 = vunpack.c.l.b16 %v1205
        %v1277 = vunpack.c.l.b16 %v1206
        %v1278 = vunpack.c.l.b16 %v1207
        %v1279 = vunpack.c.l.b16 %v1208
        %v1280 = vunpack.c.l.b16 %v1209
        %v1281 = vunpack.c.l.b16 %v1210
        %v1282 = vunpack.c.l.b16 %v1211
        %v1283 = vunpack.c.l.b16 %v1212
        %v1284 = vunpack.c.l.b16 %v1213
        %v1285 = vunpack.c.l.b16 %v1214
        %v1286 = vunpack.c.l.b16 %v1215
        %v1287 = vunpack.c.l.b16 %v1216
        %v1288 = vunpack.c.l.b16 %v1217
        %v1289 = vunpack.c.l.b16 %v1218
        %v1290 = vunpack.c.l.b16 %v1219
        %v1291 = vunpack.c.l.b16 %v1220
        %v1292 = vunpack.c.l.b16 %v1221
        %v1293 = vpack.c.b16 %v1262, %v1261
        %v1294 = vpack.c.b16 %v1264, %v1263
        %v1295 = vpack.c.b16 %v1266, %v1265
        %v1296 = vpack.c.b16 %v1268, %v1267
        %v1297 = vpack.c.b16 %v1270, %v1269
        %v1298 = vpack.c.b16 %v1272, %v1271
        %v1299 = vpack.c.b16 %v1274, %v1273
        %v1300 = vpack.c.b16 %v1276, %v1275
        %v1301 = vpack.c.b16 %v1278, %v1277
        %v1302 = vpack.c.b16 %v1280, %v1279
        %v1303 = vpack.c.b16 %v1282, %v1281
        %v1304 = vpack.c.b16 %v1284, %v1283
        %v1305 = vpack.c.b16 %v1286, %v1285
        %v1306 = vpack.c.b16 %v1288, %v1287
        %v1307 = vpack.c.b16 %v1290, %v1289
        %v1308 = vpack.c.b16 %v1292, %v1291
        %1325 = vmatprep.subr.bf16.mxu0 0
        %1326 = vmatpush1.bf16.msra.mxu0 %v1293
        %1327 = vmatprep.subr.bf16.mxu0 0
        %1328 = vmatpush1.bf16.msra.mxu0 %v1294
        %1329 = vmatprep.subr.bf16.mxu0 0
        %1330 = vmatpush1.bf16.msra.mxu0 %v1295
        %1331 = vmatprep.subr.bf16.mxu0 0
        %1332 = vmatpush1.bf16.msra.mxu0 %v1296
        %1333 = vmatprep.subr.bf16.mxu0 0
        %1334 = vmatpush1.bf16.msra.mxu0 %v1297
        %1335 = vmatprep.subr.bf16.mxu0 0
        %1336 = vmatpush1.bf16.msra.mxu0 %v1298
        %1337 = vmatprep.subr.bf16.mxu0 0
        %1338 = vmatpush1.bf16.msra.mxu0 %v1299
        %1339 = vmatprep.subr.bf16.mxu0 0
        %1340 = vmatpush1.bf16.msra.mxu0 %v1300
        %1341 = vmatprep.subr.bf16.mxu0 0
        %1342 = vmatpush1.bf16.msra.mxu0 %v1301
        %1343 = vmatprep.subr.bf16.mxu0 0
        %1344 = vmatpush1.bf16.msra.mxu0 %v1302
        %1345 = vmatprep.subr.bf16.mxu0 0
        %1346 = vmatpush1.bf16.msra.mxu0 %v1303
        %1347 = vmatprep.subr.bf16.mxu0 0
        %1348 = vmatpush1.bf16.msra.mxu0 %v1304
        %1349 = vmatprep.subr.bf16.mxu0 0
        %1350 = vmatpush1.bf16.msra.mxu0 %v1305
        %1351 = vmatprep.subr.bf16.mxu0 0
        %1352 = vmatpush1.bf16.msra.mxu0 %v1306
        %1353 = vmatprep.subr.bf16.mxu0 0
        %1354 = vmatpush1.bf16.msra.mxu0 %v1307
        %1355 = vmatprep.subr.bf16.mxu0 0
        %1356 = vmatpush1.bf16.msra.mxu0 %v1308
        %1357 = vmatprep.mubr.bf16.mxu0 %v1189
        %1358 = vmatmul.mubr.bf16.gmra.mrb[0].mxu0 %v1188
        %v1359 = vpop.f32.mrb[0].mxu0
        %v1360 = vadd.f32 %v1227, %v1359
        %v1361 = vpop.f32.mrb[0].mxu0
        %v1362 = vpop.f32.mrb[0].mxu0
        %v1363 = vadd.f32 %v1227, %v1362
        %v1364 = vpop.f32.mrb[0].mxu0
        %1365 = vdwg.mxu0
        %v1366 = vmax.f32 %v1360, 0.0
        %v1367 = vmax.f32 %v1363, 0.0
        %v1368 = vld [vmem:[%s7] sm:$0xff]
        %v1369 = vld [vmem:[%s7 + $0x8] sm:$0xff]
        %v1370 = vld [vmem:[%s7 + $0x10] sm:$0xff]
        %v1371 = vld [vmem:[%s7 + $0x18] sm:$0xff]
        %v1372 = vld [vmem:[%s7 + $0x20] sm:$0xff]
        %v1373 = vld [vmem:[%s7 + $0x28] sm:$0xff]
        %v1374 = vld [vmem:[%s7 + $0x30] sm:$0xff]
        %v1375 = vld [vmem:[%s7 + $0x38] sm:$0xff]
        %v1376 = vld [vmem:[%s7 + $0x40] sm:$0xff]
        %v1377 = vld [vmem:[%s7 + $0x48] sm:$0xff]
        %v1378 = vld [vmem:[%s7 + $0x50] sm:$0xff]
        %v1379 = vld [vmem:[%s7 + $0x58] sm:$0xff]
        %v1380 = vld [vmem:[%s7 + $0x60] sm:$0xff]
        %v1381 = vld [vmem:[%s7 + $0x68] sm:$0xff]
        %v1382 = vld [vmem:[%s7 + $0x70] sm:$0xff]
        %v1383 = vld [vmem:[%s7 + $0x78] sm:$0xff]
        %v1384 = vld [vmem:[%s8] sm:$0x1]
        %v1386 = vlaneseq
        %v1387 = vshrl.u32 %v1386, 7
        %v1388 = vsub.s32 0, %v1387
        %v1389 = vrot.slane %v1384, %v1388
        %1391 = vmatprep.subr.mxu0 0.0
        %1392 = vmatpush1.msra.mxu0 %v1368
        %1393 = vmatprep.subr.mxu0 0.0
        %1394 = vmatpush1.msra.mxu0 %v1369
        %1395 = vmatprep.subr.mxu0 0.0
        %1396 = vmatpush1.msra.mxu0 %v1370
        %1397 = vmatprep.subr.mxu0 0.0
        %1398 = vmatpush1.msra.mxu0 %v1371
        %1399 = vmatprep.subr.mxu0 0.0
        %1400 = vmatpush1.msra.mxu0 %v1372
        %1401 = vmatprep.subr.mxu0 0.0
        %1402 = vmatpush1.msra.mxu0 %v1373
        %1403 = vmatprep.subr.mxu0 0.0
        %1404 = vmatpush1.msra.mxu0 %v1374
        %1405 = vmatprep.subr.mxu0 0.0
        %1406 = vmatpush1.msra.mxu0 %v1375
        %1407 = vmatprep.subr.mxu0 0.0
        %1408 = vmatpush1.msra.mxu0 %v1376
        %1409 = vmatprep.subr.mxu0 0.0
        %1410 = vmatpush1.msra.mxu0 %v1377
        %1411 = vmatprep.subr.mxu0 0.0
        %1412 = vmatpush1.msra.mxu0 %v1378
        %1413 = vmatprep.subr.mxu0 0.0
        %1414 = vmatpush1.msra.mxu0 %v1379
        %1415 = vmatprep.subr.mxu0 0.0
        %1416 = vmatpush1.msra.mxu0 %v1380
        %1417 = vmatprep.subr.mxu0 0.0
        %1418 = vmatpush1.msra.mxu0 %v1381
        %1419 = vmatprep.subr.mxu0 0.0
        %1420 = vmatpush1.msra.mxu0 %v1382
        %1421 = vmatprep.subr.mxu0 0.0
        %1422 = vmatpush1.msra.mxu0 %v1383
        %1423 = vmatprep.subr.mxu0 0.0
        %1424 = vmatpush1.msra.mxu0 0.0
        %1425 = vmatprep.subr.mxu0 0.0
        %1426 = vmatpush1.msra.mxu0 0.0
        %1427 = vmatprep.subr.mxu0 0.0
        %1428 = vmatpush1.msra.mxu0 0.0
        %1429 = vmatprep.subr.mxu0 0.0
        %1430 = vmatpush1.msra.mxu0 0.0
        %1431 = vmatprep.subr.mxu0 0.0
        %1432 = vmatpush1.msra.mxu0 0.0
        %1433 = vmatprep.subr.mxu0 0.0
        %1434 = vmatpush1.msra.mxu0 0.0
        %1435 = vmatprep.subr.mxu0 0.0
        %1436 = vmatpush1.msra.mxu0 0.0
        %1437 = vmatprep.subr.mxu0 0.0
        %1438 = vmatpush1.msra.mxu0 0.0
        %1439 = vmatprep.subr.mxu0 0.0
        %1440 = vmatpush1.msra.mxu0 0.0
        %1441 = vmatprep.subr.mxu0 0.0
        %1442 = vmatpush1.msra.mxu0 0.0
        %1443 = vmatprep.subr.mxu0 0.0
        %1444 = vmatpush1.msra.mxu0 0.0
        %1445 = vmatprep.subr.mxu0 0.0
        %1446 = vmatpush1.msra.mxu0 0.0
        %1447 = vmatprep.subr.mxu0 0.0
        %1448 = vmatpush1.msra.mxu0 0.0
        %1449 = vmatprep.subr.mxu0 0.0
        %1450 = vmatpush1.msra.mxu0 0.0
        %1451 = vmatprep.subr.mxu0 0.0
        %1452 = vmatpush1.msra.mxu0 0.0
        %1453 = vmatprep.subr.mxu0 0.0
        %1454 = vmatpush1.msra.mxu0 0.0
        %1455 = vmatprep.mubr.f32.mxu0 0.0
        %1456 = vmatmul.mubr.f32.gmra.mrb[0].mxu0 %v1366
        %v1457 = vpop.f32.mrb[0].mxu0
        %v1458 = vadd.f32 %v1389, %v1457
        %v1459 = vpop.f32.mrb[0].mxu0
        %1460 = vmatprep.mubr.f32.mxu0 0.0
        %1461 = vmatmul.mubr.f32.gmra.mrb[0].mxu0 %v1367
        %v1462 = vpop.f32.mrb[0].mxu0
        %v1463 = vadd.f32 %v1389, %v1462
        %v1464 = vpop.f32.mrb[0].mxu0
        %1465 = vdwg.mxu0
        %vm1466 = vcmask 15360
        %1467 = vst.msk [vmem:[%s403] sm:$0xff] %vm1466, %v1458
        %1468 = vst.msk [vmem:[%s403 + $0x8] sm:$0xff] %vm1466, %v1463
        %s1469 = smul.u32 2, %s20
        %p1470 = scmp.lt.s32.totalorder %s1469, 3
        %s1471 = scalar_select %p1470, %s1469, 3
        %s1472 = smul.addr %s1471, 8
        %s1473 = scalar_lea.vmem %s9, %s1472
        // Predicated region
        $region98: #{incept_dilationconv_forward.1} parent=92 // pred_check
          %p1474 = pneg %p232
        $region99: #{incept_dilationconv_forward.1} parent=92 // pred_check_branch
          %1476 = sbr.rel (%p1474) target = $region101
        $region100: #{incept_dilationconv_forward.1} parent=92 // pred_region
          %s1477 = smul.u32 2, %s20
        $region101: #{incept_dilationconv_forward.1} parent=92 // pred_fallthru
          _
      $region93: #{incept_dilationconv_forward.1} parent=5 // pred_fallthru
        _
      %p1478 = scmp.le.s32.totalorder 2, %s15
      // Predicated region
      $region102: #{incept_dilationconv_forward.1} parent=5 // pred_check
        %p1479 = pneg %p1478
      $region103: #{incept_dilationconv_forward.1} parent=5 // pred_check_branch
        %1481 = sbr.rel (%p1479) target = $region105
      $region104: #{incept_dilationconv_forward.1} parent=5 // pred_region
        %s1482 = ssub.s32 %s15, 2
        // Predicated region
        $region106: #{incept_dilationconv_forward.1} parent=104 // pred_check
          %p1483 = pneg %p238
        $region107: #{incept_dilationconv_forward.1} parent=104 // pred_check_branch
          %1485 = sbr.rel (%p1483) target = $region109
        $region108: #{incept_dilationconv_forward.1} parent=104 // pred_region
          %s1486 = smul.u32 2, %s21
          %p1487 = scmp.lt.s32.totalorder %s1486, 3
          %s1488 = scalar_select %p1487, %s1486, 3
          %s1489 = smul.addr %s1488, 8
          %s1490 = scalar_lea.vmem %s9, %s1489
        $region109: #{incept_dilationconv_forward.1} parent=104 // pred_fallthru
          _
      $region105: #{incept_dilationconv_forward.1} parent=5 // pred_fallthru
        _
    $region6: #{incept_dilationconv_forward.1} parent=1 // loop_footer
      %s19 = sadd.s32 1, %s15
    $region7: #{incept_dilationconv_forward.1} parent=1 // loop_footer_branch
      %14 = sbr.rel target = $region3
    $region8: #{incept_dilationconv_forward.1} parent=1 // loop_exit
      _

</llo_original>
